<compile_context>
chip_gen: v6e
topology: v6e:2x2x1
jax: 0.10.0
libtpu: 0.0.40
codegen_flags: <defaults>
</compile_context>

<pallas_src>
import jax
import jax.numpy as jnp
from jax.experimental import pallas as pl
from jax.experimental.pallas import tpu as pltpu

IN_DIM = 784
HID_DIM = 512
OUT_DIM = 10
OUT_PAD = 128  # lane-dense padded width of the final layer


def mlp_kernel(x_ref, w1_ref, b1_ref, w2_ref, b2_ref, w3_ref, b3_ref, o_ref):
    # layer 1: (TB, 784)bf16 @ (784, 512)bf16 -> f32 accum, +bias, ReLU
    h1 = jnp.dot(x_ref[...], w1_ref[...], preferred_element_type=jnp.float32)
    h1 = jnp.maximum(h1 + b1_ref[...], 0.0).astype(jnp.bfloat16)
    # layer 2: (TB, 512) @ (512, 512) -> f32 accum, +bias, ReLU
    h2 = jnp.dot(h1, w2_ref[...], preferred_element_type=jnp.float32)
    h2 = jnp.maximum(h2 + b2_ref[...], 0.0).astype(jnp.bfloat16)
    # layer 3: (TB, 512) @ (512, 128-padded), no activation
    y = jnp.dot(h2, w3_ref[...], preferred_element_type=jnp.float32)
    o_ref[...] = (y + b3_ref[...]).astype(o_ref.dtype)


def prepare_params(params):
    """One-time prep of torch-convention params for the kernel.

    Transposes (out, in) -> (in, out), casts weights to bf16 for the MXU,
    keeps biases in f32 (added onto the f32 accumulator), and zero-pads the
    last layer from 10 to 128 output lanes.  Call once; reuse every forward.
    """
    w3 = params["w3"].T.astype(jnp.bfloat16)  # (512, 10)
    w3p = jnp.zeros((HID_DIM, OUT_PAD), jnp.bfloat16).at[:, :OUT_DIM].set(w3)
    b3p = jnp.zeros((1, OUT_PAD), jnp.float32).at[:, :OUT_DIM].set(
        params["b3"].astype(jnp.float32).reshape(1, OUT_DIM))
    return {
        "w1": params["w1"].T.astype(jnp.bfloat16),                    # (784, 512)
        "b1": params["b1"].astype(jnp.float32).reshape(1, HID_DIM),   # (1, 512)
        "w2": params["w2"].T.astype(jnp.bfloat16),                    # (512, 512)
        "b2": params["b2"].astype(jnp.float32).reshape(1, HID_DIM),   # (1, 512)
        "w3": w3p,                                                    # (512, 128)
        "b3": b3p,                                                    # (1, 128)
    }


def _pick_batch_tile(B):
    # MXU-filling tile (<= 256 rows, multiple of 8 sublanes) with >= 2 grid
    # steps when the batch allows, so the 'parallel' batch axis can be split
    # across v7x's two TensorCores.  Tiny/odd batches fall back to one step.
    for cand in (256, 128, 64, 32, 16, 8):
        if B % cand == 0 and B // cand >= 2:
            return cand
    return B


def mlp_forward(x, kparams, *, batch_tile=None):
    """x: (B, 784) float32.  kparams: output of prepare_params()."""
    B = x.shape[0]
    if batch_tile is None:
        batch_tile = _pick_batch_tile(B)
    assert B % batch_tile == 0, (B, batch_tile)

    # Cast activations in the wrapper so the pipelined x DMA moves bf16 bytes.
    x_bf16 = x.astype(jnp.bfloat16)

    grid = (B // batch_tile,)
    # Weights/biases: full-array blocks with constant index_map -> resident in
    # VMEM across all grid steps (no re-DMA per step).
    full = lambda shape: pl.BlockSpec(shape, lambda i: (0, 0))

    out_pad = pl.pallas_call(
        mlp_kernel,
        out_shape=jax.ShapeDtypeStruct((B, OUT_PAD), jnp.float32),
        grid_spec=pltpu.PrefetchScalarGridSpec(
            num_scalar_prefetch=0,
            grid=grid,
            in_specs=[
                pl.BlockSpec((batch_tile, IN_DIM), lambda i: (i, 0)),  # x tile
                full((IN_DIM, HID_DIM)),    # w1
                full((1, HID_DIM)),         # b1
                full((HID_DIM, HID_DIM)),   # w2
                full((1, HID_DIM)),         # b2
                full((HID_DIM, OUT_PAD)),   # w3 (lane-padded)
                full((1, OUT_PAD)),         # b3 (lane-padded)
            ],
            out_specs=pl.BlockSpec((batch_tile, OUT_PAD), lambda i: (i, 0)),
        ),
        compiler_params=pltpu.CompilerParams(
            dimension_semantics=("parallel",)),
    )(x_bf16, kparams["w1"], kparams["b1"], kparams["w2"], kparams["b2"],
      kparams["w3"], kparams["b3"])

    return out_pad[:, :OUT_DIM]


def init_params(key):
    """Deterministic init matching torch.nn.Linear default U(-1/sqrt(in), 1/sqrt(in))."""
    ks = jax.random.split(key, 6)

    def uniform(k, shape, fan_in):
        bound = 1.0 / jnp.sqrt(jnp.float32(fan_in))
        return jax.random.uniform(k, shape, jnp.float32, -bound, bound)

    return {
        "w1": uniform(ks[0], (HID_DIM, IN_DIM), IN_DIM),
        "b1": uniform(ks[1], (HID_DIM,), IN_DIM),
        "w2": uniform(ks[2], (HID_DIM, HID_DIM), HID_DIM),
        "b2": uniform(ks[3], (HID_DIM,), HID_DIM),
        "w3": uniform(ks[4], (OUT_DIM, HID_DIM), HID_DIM),
        "b3": uniform(ks[5], (OUT_DIM,), HID_DIM),
    }


def mlp_reference(x, params):
    """Pure-f32 reference with PyTorch nn.Linear semantics."""
    h1 = jnp.maximum(x @ params["w1"].T + params["b1"], 0.0)
    h2 = jnp.maximum(h1 @ params["w2"].T + params["b2"], 0.0)
    return h2 @ params["w3"].T + params["b3"]


if __name__ == "__main__":
    key = jax.random.PRNGKey(0)
    pkey, xkey = jax.random.split(key)

    params = init_params(pkey)        # torch-convention (out, in) weights, f32
    kparams = prepare_params(params)  # one-time transpose / bf16 cast / lane-pad

    B = 32  # small demo batch; default tiling gives 2 grid steps of 16 rows
    x = jax.random.normal(xkey, (B, IN_DIM), jnp.float32)

    out = mlp_forward(x, kparams)
    out = jax.block_until_ready(out)

    ref = mlp_reference(x, params)
    assert out.shape == (B, OUT_DIM)
    # bf16 matmuls (f32 accumulation) vs f32 reference: relaxed tolerance.
    assert jnp.allclose(out, ref, atol=5e-2, rtol=5e-2), float(
        jnp.max(jnp.abs(out - ref)))

    print("KERNEL_OK")
</pallas_src>

<mosaic_0001>
module attributes {stable_mosaic.version = 11 : i64} {
  func.func @mlp_kernel(%arg0: i32, %arg1: memref<16x784xbf16, #tpu.memory_space<vmem>>, %arg2: memref<784x512xbf16, #tpu.memory_space<vmem>>, %arg3: memref<1x512xf32, #tpu.memory_space<vmem>>, %arg4: memref<512x512xbf16, #tpu.memory_space<vmem>>, %arg5: memref<1x512xf32, #tpu.memory_space<vmem>>, %arg6: memref<512x128xbf16, #tpu.memory_space<vmem>>, %arg7: memref<1x128xf32, #tpu.memory_space<vmem>>, %arg8: memref<16x128xf32, #tpu.memory_space<vmem>>) attributes {dimension_semantics = [#tpu.dimension_semantics<parallel>], iteration_bounds = array<i64: 2>, scalar_prefetch = 0 : i64, scratch_operands = 0 : i64, tpu.core_type = #tpu.core_type<tc>, window_params = [{transform_indices = @transform_0, window_bounds = array<i64: 16, 784>}, {pipeline_mode = #tpu.pipeline_mode<synchronous>, transform_indices = @transform_1, window_bounds = array<i64: 784, 512>}, {pipeline_mode = #tpu.pipeline_mode<synchronous>, transform_indices = @transform_2, window_bounds = array<i64: 1, 512>}, {pipeline_mode = #tpu.pipeline_mode<synchronous>, transform_indices = @transform_3, window_bounds = array<i64: 512, 512>}, {pipeline_mode = #tpu.pipeline_mode<synchronous>, transform_indices = @transform_4, window_bounds = array<i64: 1, 512>}, {pipeline_mode = #tpu.pipeline_mode<synchronous>, transform_indices = @transform_5, window_bounds = array<i64: 512, 128>}, {pipeline_mode = #tpu.pipeline_mode<synchronous>, transform_indices = @transform_6, window_bounds = array<i64: 1, 128>}, {transform_indices = @transform_7, window_bounds = array<i64: 16, 128>}]} {
    %c0 = arith.constant 0 : index
    %c0_0 = arith.constant 0 : index
    %0 = vector.load %arg1[%c0, %c0_0] : memref<16x784xbf16, #tpu.memory_space<vmem>>, vector<16x784xbf16>
    %c0_1 = arith.constant 0 : index
    %c0_2 = arith.constant 0 : index
    %1 = vector.load %arg2[%c0_1, %c0_2] : memref<784x512xbf16, #tpu.memory_space<vmem>>, vector<784x512xbf16>
    %cst = arith.constant dense<0.000000e+00> : vector<16x512xf32>
    %2 = tpu.matmul %0, %1, %cst {dimension_numbers = #tpu.dot_dimension_numbers<[1], [0], [0], [1], [0, 0, 1, 1], [], []>} : vector<16x784xbf16>, vector<784x512xbf16>, vector<16x512xf32> -> vector<16x512xf32>
    %c0_3 = arith.constant 0 : index
    %c0_4 = arith.constant 0 : index
    %3 = vector.load %arg3[%c0_3, %c0_4] : memref<1x512xf32, #tpu.memory_space<vmem>>, vector<1x512xf32>
    %4 = vector.broadcast %3 : vector<1x512xf32> to vector<16x512xf32>
    %5 = arith.addf %2, %4 : vector<16x512xf32>
    %cst_5 = arith.constant 0.000000e+00 : f32
    %6 = vector.broadcast %cst_5 : f32 to vector<16x512xf32>
    %7 = arith.maximumf %5, %6 : vector<16x512xf32>
    %8 = arith.truncf %7 : vector<16x512xf32> to vector<16x512xbf16>
    %c0_6 = arith.constant 0 : index
    %c0_7 = arith.constant 0 : index
    %9 = vector.load %arg4[%c0_6, %c0_7] : memref<512x512xbf16, #tpu.memory_space<vmem>>, vector<512x512xbf16>
    %cst_8 = arith.constant dense<0.000000e+00> : vector<16x512xf32>
    %10 = tpu.matmul %8, %9, %cst_8 {dimension_numbers = #tpu.dot_dimension_numbers<[1], [0], [0], [1], [0, 0, 1, 1], [], []>} : vector<16x512xbf16>, vector<512x512xbf16>, vector<16x512xf32> -> vector<16x512xf32>
    %c0_9 = arith.constant 0 : index
    %c0_10 = arith.constant 0 : index
    %11 = vector.load %arg5[%c0_9, %c0_10] : memref<1x512xf32, #tpu.memory_space<vmem>>, vector<1x512xf32>
    %12 = vector.broadcast %11 : vector<1x512xf32> to vector<16x512xf32>
    %13 = arith.addf %10, %12 : vector<16x512xf32>
    %cst_11 = arith.constant 0.000000e+00 : f32
    %14 = vector.broadcast %cst_11 : f32 to vector<16x512xf32>
    %15 = arith.maximumf %13, %14 : vector<16x512xf32>
    %16 = arith.truncf %15 : vector<16x512xf32> to vector<16x512xbf16>
    %c0_12 = arith.constant 0 : index
    %c0_13 = arith.constant 0 : index
    %17 = vector.load %arg6[%c0_12, %c0_13] : memref<512x128xbf16, #tpu.memory_space<vmem>>, vector<512x128xbf16>
    %cst_14 = arith.constant dense<0.000000e+00> : vector<16x128xf32>
    %18 = tpu.matmul %16, %17, %cst_14 {dimension_numbers = #tpu.dot_dimension_numbers<[1], [0], [0], [1], [0, 0, 1, 1], [], []>} : vector<16x512xbf16>, vector<512x128xbf16>, vector<16x128xf32> -> vector<16x128xf32>
    %c0_15 = arith.constant 0 : index
    %c0_16 = arith.constant 0 : index
    %19 = vector.load %arg7[%c0_15, %c0_16] : memref<1x128xf32, #tpu.memory_space<vmem>>, vector<1x128xf32>
    %20 = vector.broadcast %19 : vector<1x128xf32> to vector<16x128xf32>
    %21 = arith.addf %18, %20 : vector<16x128xf32>
    %c0_17 = arith.constant 0 : index
    %c0_18 = arith.constant 0 : index
    %22 = vector.load %arg8[%c0_17, %c0_18] : memref<16x128xf32, #tpu.memory_space<vmem>>, vector<16x128xf32>
    tpu.vector_store %arg8[%c0_17, %c0_18], %21 {strides = array<i32>} : memref<16x128xf32, #tpu.memory_space<vmem>>, vector<16x128xf32>,
    return
  }
  func.func @transform_0(%arg0: i32) -> (i32, i32) {
    %c0_i32 = arith.constant 0 : i32
    %c0_i32_0 = arith.constant 0 : i32
    return %arg0, %c0_i32 : i32, i32
  }
  func.func @transform_1(%arg0: i32) -> (i32, i32) {
    %c0_i32 = arith.constant 0 : i32
    %c0_i32_0 = arith.constant 0 : i32
    %c0_i32_1 = arith.constant 0 : i32
    return %c0_i32, %c0_i32_0 : i32, i32
  }
  func.func @transform_2(%arg0: i32) -> (i32, i32) {
    %c0_i32 = arith.constant 0 : i32
    %c0_i32_0 = arith.constant 0 : i32
    %c0_i32_1 = arith.constant 0 : i32
    return %c0_i32, %c0_i32_0 : i32, i32
  }
  func.func @transform_3(%arg0: i32) -> (i32, i32) {
    %c0_i32 = arith.constant 0 : i32
    %c0_i32_0 = arith.constant 0 : i32
    %c0_i32_1 = arith.constant 0 : i32
    return %c0_i32, %c0_i32_0 : i32, i32
  }
  func.func @transform_4(%arg0: i32) -> (i32, i32) {
    %c0_i32 = arith.constant 0 : i32
    %c0_i32_0 = arith.constant 0 : i32
    %c0_i32_1 = arith.constant 0 : i32
    return %c0_i32, %c0_i32_0 : i32, i32
  }
  func.func @transform_5(%arg0: i32) -> (i32, i32) {
    %c0_i32 = arith.constant 0 : i32
    %c0_i32_0 = arith.constant 0 : i32
    %c0_i32_1 = arith.constant 0 : i32
    return %c0_i32, %c0_i32_0 : i32, i32
  }
  func.func @transform_6(%arg0: i32) -> (i32, i32) {
    %c0_i32 = arith.constant 0 : i32
    %c0_i32_0 = arith.constant 0 : i32
    %c0_i32_1 = arith.constant 0 : i32
    return %c0_i32, %c0_i32_0 : i32, i32
  }
  func.func @transform_7(%arg0: i32) -> (i32, i32) {
    %c0_i32 = arith.constant 0 : i32
    %c0_i32_0 = arith.constant 0 : i32
    return %arg0, %c0_i32 : i32, i32
  }
}

</mosaic_0001>

<llo_original>
// kernel: tpu_custom_call.1
$region0: #{tpu_custom_call.1}
  #allocation0 [shape = 'u32[]', space=smem, size = 0x4, offset = 0x4, fixed_abs, tag = 'smem constant byte address 0x4 - core index']
  #allocation1 [shape = 'u32[144,128]{1,0:T(1,128)}', space=vmem, size = 0x12000, scoped, tag = 'internal scratch']
  %s0 = inlined_call_operand.hbm [shape: bf16[32,784], index: 0, kind: input, shape index: {}]
  %s1 = inlined_call_operand.hbm [shape: bf16[784,512], index: 1, kind: input, shape index: {}]
  %s2 = inlined_call_operand.hbm [shape: f32[1,512], index: 2, kind: input, shape index: {}]
  %s3 = inlined_call_operand.hbm [shape: bf16[512,512], index: 3, kind: input, shape index: {}]
  %s4 = inlined_call_operand.vmem [shape: f32[1,512], index: 4, kind: input, shape index: {}]
  %s5 = inlined_call_operand.hbm [shape: bf16[512,128], index: 5, kind: input, shape index: {}]
  %s6 = inlined_call_operand.vmem [shape: f32[1,128], index: 6, kind: input, shape index: {}]
  %s7 = inlined_call_operand.hbm [shape: f32[32,128], index: 7, kind: output, shape index: {}]
  %s8 = sld [smem:[#allocation0]]
  $region81: #{tpu_custom_call.1} parent=0
    _
  %s10 = ssub.s32 1, %s8
  %s11 = scalar_select 0, %s10, %s8
  $region1: #{tpu_custom_call.1} parent=0
    #allocation2 [shape = 'u8[57344]{0}', space=vmem, size = 0xe000, scoped, tag = 'input window, operand 0']
    #allocation3 [shape = 's32[2]{0}', space=sflag, size = 0x8, scoped, tag = 'scoped memory for tpu_custom_call.1']
    #allocation4 [shape = 's32[2]{0}', space=sflag, size = 0x8, scoped, tag = 'scoped memory for tpu_custom_call.1']
    #allocation5 [shape = 'u8[802816]{0}', space=vmem, size = 0xc4000, scoped, tag = 'input window, operand 1, single buffered']
    #allocation6 [shape = 's32[1]{0}', space=sflag, size = 0x4, scoped, tag = 'scoped memory for tpu_custom_call.1']
    #allocation7 [shape = 'u8[2048]{0}', space=vmem, size = 0x800, scoped, tag = 'input window, operand 2, single buffered']
    #allocation8 [shape = 'u8[524288]{0}', space=vmem, size = 0x80000, scoped, tag = 'input window, operand 3, single buffered']
    #allocation9 [shape = 's32[1]{0}', space=sflag, size = 0x4, scoped, tag = 'scoped memory for tpu_custom_call.1']
    #allocation10 [shape = 'u8[131072]{0}', space=vmem, size = 0x20000, scoped, tag = 'input window, operand 5, single buffered']
    #allocation11 [shape = 'u8[16384]{0}', space=vmem, size = 0x4000, scoped, tag = 'output window, operand 0']
    %12 = vsyncpa [#allocation3], 0
    %s13 = scalar_lea.sflag [#allocation3], 1
    %14 = vsyncpa %s13, 0
    %15 = vsyncpa [#allocation6], 0
    %16 = vsyncpa [#allocation9], 0
    %17 = vsyncpa [#allocation4], 0
    %s18 = scalar_lea.sflag [#allocation4], 1
    %19 = vsyncpa %s18, 0
    loop: start=0, step=1, limit=4
    $region2: #{tpu_custom_call.1} parent=1 // loop_pre_header
      _
    $region3: #{tpu_custom_call.1} parent=1 // loop_header
      %s21 = sphi 0, %s25
      %p22 = scmp.ge.s32.totalorder %s21, 4
      %s31 = sphi 0, %s33
      %s34 = sphi 0, %s31
      %s35 = sphi 0, %s34
      %s51 = sphi 0, %s35
      %s55 = sphi 0, %s55
      %s57 = sphi 0, %s55
      %s58 = sphi 0, %s57
      %s72 = sphi 0, %s58
      %s76 = sphi 0, %s76
      %s78 = sphi 0, %s76
      %s79 = sphi 0, %s78
      %s93 = sphi 0, %s79
      %s97 = sphi 0, %s97
      %s99 = sphi 0, %s97
      %s100 = sphi 0, %s99
      %s114 = sphi 0, %s100
      %s118 = sphi 0, %s118
      %s120 = sphi 0, %s118
      %s121 = sphi 0, %s120
      %s135 = sphi 0, %s121
      %s139 = sphi 0, %s139
      %s141 = sphi 0, %s139
      %s142 = sphi 0, %s141
      %s156 = sphi 0, %s142
      %s160 = sphi 0, %s160
      %s162 = sphi 0, %s160
      %s163 = sphi 0, %s162
      %s177 = sphi 0, %s163
      %s183 = sphi 0, %s185
      %s186 = sphi 0, %s183
      %s187 = sphi 0, %s186
      %s203 = sphi 0, %s187
    $region4: #{tpu_custom_call.1} parent=1 // loop_header_branch
      %24 = sbr.rel (%p22) target = $region8
    $region5: #{tpu_custom_call.1} parent=1 // loop_body
      %s26 = ssub.s32 %s21, 1
      %s27 = ssub.s32 %s21, 2
      %s28 = sadd.s32 %s21, 1
      %s29 = ssub.s32 %s21, %s28
      %p30 = scmp.eq.s32.totalorder %s29, 0
      %s32 = sadd.s32 %s31, 1
      %s33 = scalar_select %p30, %s31, %s32
      %p36 = pneg %p30
      %p37 = scmp.eq.s32.totalorder %s21, 1
      %p38 = por %p36, %p37
      %p39 = scmp.ne.s32.totalorder %s31, %s34
      %p40 = scmp.eq.s32.totalorder %s21, 0
      %p41 = por %p39, %p40
      %p42 = scmp.ne.s32.totalorder %s31, %s34
      %p43 = scmp.eq.s32.totalorder %s26, 1
      %p44 = por %p42, %p43
      %p45 = scmp.ne.s32.totalorder %s34, %s35
      %p46 = scmp.eq.s32.totalorder %s26, 0
      %p47 = por %p45, %p46
      %p48 = scmp.ne.s32.totalorder %s34, %s35
      %p49 = scmp.eq.s32.totalorder %s27, 1
      %p50 = por %p48, %p49
      %p52 = scmp.ne.s32.totalorder %s35, %s51
      %p53 = scmp.eq.s32.totalorder %s27, 0
      %p54 = por %p52, %p53
      %s56 = sadd.s32 %s55, 1
      %p59 = scmp.eq.s32.totalorder %s21, 1
      %p60 = scmp.ne.s32.totalorder %s55, %s57
      %p61 = scmp.eq.s32.totalorder %s21, 0
      %p62 = por %p60, %p61
      %p63 = scmp.ne.s32.totalorder %s55, %s57
      %p64 = scmp.eq.s32.totalorder %s26, 1
      %p65 = por %p63, %p64
      %p66 = scmp.ne.s32.totalorder %s57, %s58
      %p67 = scmp.eq.s32.totalorder %s26, 0
      %p68 = por %p66, %p67
      %p69 = scmp.ne.s32.totalorder %s57, %s58
      %p70 = scmp.eq.s32.totalorder %s27, 1
      %p71 = por %p69, %p70
      %p73 = scmp.ne.s32.totalorder %s58, %s72
      %p74 = scmp.eq.s32.totalorder %s27, 0
      %p75 = por %p73, %p74
      %s77 = sadd.s32 %s76, 1
      %p80 = scmp.eq.s32.totalorder %s21, 1
      %p81 = scmp.ne.s32.totalorder %s76, %s78
      %p82 = scmp.eq.s32.totalorder %s21, 0
      %p83 = por %p81, %p82
      %p84 = scmp.ne.s32.totalorder %s76, %s78
      %p85 = scmp.eq.s32.totalorder %s26, 1
      %p86 = por %p84, %p85
      %p87 = scmp.ne.s32.totalorder %s78, %s79
      %p88 = scmp.eq.s32.totalorder %s26, 0
      %p89 = por %p87, %p88
      %p90 = scmp.ne.s32.totalorder %s78, %s79
      %p91 = scmp.eq.s32.totalorder %s27, 1
      %p92 = por %p90, %p91
      %p94 = scmp.ne.s32.totalorder %s79, %s93
      %p95 = scmp.eq.s32.totalorder %s27, 0
      %p96 = por %p94, %p95
      %s98 = sadd.s32 %s97, 1
      %p101 = scmp.eq.s32.totalorder %s21, 1
      %p102 = scmp.ne.s32.totalorder %s97, %s99
      %p103 = scmp.eq.s32.totalorder %s21, 0
      %p104 = por %p102, %p103
      %p105 = scmp.ne.s32.totalorder %s97, %s99
      %p106 = scmp.eq.s32.totalorder %s26, 1
      %p107 = por %p105, %p106
      %p108 = scmp.ne.s32.totalorder %s99, %s100
      %p109 = scmp.eq.s32.totalorder %s26, 0
      %p110 = por %p108, %p109
      %p111 = scmp.ne.s32.totalorder %s99, %s100
      %p112 = scmp.eq.s32.totalorder %s27, 1
      %p113 = por %p111, %p112
      %p115 = scmp.ne.s32.totalorder %s100, %s114
      %p116 = scmp.eq.s32.totalorder %s27, 0
      %p117 = por %p115, %p116
      %s119 = sadd.s32 %s118, 1
      %p122 = scmp.eq.s32.totalorder %s21, 1
      %p123 = scmp.ne.s32.totalorder %s118, %s120
      %p124 = scmp.eq.s32.totalorder %s21, 0
      %p125 = por %p123, %p124
      %p126 = scmp.ne.s32.totalorder %s118, %s120
      %p127 = scmp.eq.s32.totalorder %s26, 1
      %p128 = por %p126, %p127
      %p129 = scmp.ne.s32.totalorder %s120, %s121
      %p130 = scmp.eq.s32.totalorder %s26, 0
      %p131 = por %p129, %p130
      %p132 = scmp.ne.s32.totalorder %s120, %s121
      %p133 = scmp.eq.s32.totalorder %s27, 1
      %p134 = por %p132, %p133
      %p136 = scmp.ne.s32.totalorder %s121, %s135
      %p137 = scmp.eq.s32.totalorder %s27, 0
      %p138 = por %p136, %p137
      %s140 = sadd.s32 %s139, 1
      %p143 = scmp.eq.s32.totalorder %s21, 1
      %p144 = scmp.ne.s32.totalorder %s139, %s141
      %p145 = scmp.eq.s32.totalorder %s21, 0
      %p146 = por %p144, %p145
      %p147 = scmp.ne.s32.totalorder %s139, %s141
      %p148 = scmp.eq.s32.totalorder %s26, 1
      %p149 = por %p147, %p148
      %p150 = scmp.ne.s32.totalorder %s141, %s142
      %p151 = scmp.eq.s32.totalorder %s26, 0
      %p152 = por %p150, %p151
      %p153 = scmp.ne.s32.totalorder %s141, %s142
      %p154 = scmp.eq.s32.totalorder %s27, 1
      %p155 = por %p153, %p154
      %p157 = scmp.ne.s32.totalorder %s142, %s156
      %p158 = scmp.eq.s32.totalorder %s27, 0
      %p159 = por %p157, %p158
      %s161 = sadd.s32 %s160, 1
      %p164 = scmp.eq.s32.totalorder %s21, 1
      %p165 = scmp.ne.s32.totalorder %s160, %s162
      %p166 = scmp.eq.s32.totalorder %s21, 0
      %p167 = por %p165, %p166
      %p168 = scmp.ne.s32.totalorder %s160, %s162
      %p169 = scmp.eq.s32.totalorder %s26, 1
      %p170 = por %p168, %p169
      %p171 = scmp.ne.s32.totalorder %s162, %s163
      %p172 = scmp.eq.s32.totalorder %s26, 0
      %p173 = por %p171, %p172
      %p174 = scmp.ne.s32.totalorder %s162, %s163
      %p175 = scmp.eq.s32.totalorder %s27, 1
      %p176 = por %p174, %p175
      %p178 = scmp.ne.s32.totalorder %s163, %s177
      %p179 = scmp.eq.s32.totalorder %s27, 0
      %p180 = por %p178, %p179
      %s181 = ssub.s32 %s21, %s28
      %p182 = scmp.eq.s32.totalorder %s181, 0
      %s184 = sadd.s32 %s183, 1
      %s185 = scalar_select %p182, %s183, %s184
      %p188 = pneg %p182
      %p189 = scmp.eq.s32.totalorder %s21, 1
      %p190 = por %p188, %p189
      %p191 = scmp.ne.s32.totalorder %s183, %s186
      %p192 = scmp.eq.s32.totalorder %s21, 0
      %p193 = por %p191, %p192
      %p194 = scmp.ne.s32.totalorder %s183, %s186
      %p195 = scmp.eq.s32.totalorder %s26, 1
      %p196 = por %p194, %p195
      %p197 = scmp.ne.s32.totalorder %s186, %s187
      %p198 = scmp.eq.s32.totalorder %s26, 0
      %p199 = por %p197, %p198
      %p200 = scmp.ne.s32.totalorder %s186, %s187
      %p201 = scmp.eq.s32.totalorder %s27, 1
      %p202 = por %p200, %p201
      %p204 = scmp.ne.s32.totalorder %s187, %s203
      %p205 = scmp.eq.s32.totalorder %s27, 0
      %p206 = por %p204, %p205
      %p207 = scmp.le.s32.totalorder 1, %s21
      %p208 = scmp.lt.s32.totalorder %s21, 3
      %p209 = pnand %p207, %p208
      %p210 = pneg %p209
      // Predicated region
      $region9: #{tpu_custom_call.1} parent=5 // pred_check
        _
      $region10: #{tpu_custom_call.1} parent=5 // pred_check_branch
        %212 = sbr.rel (%p209) target = $region12
      $region11: #{tpu_custom_call.1} parent=5 // pred_region
        %s213 = ssub.s32 %s21, 1
        // Predicated region
        $region13: #{tpu_custom_call.1} parent=11 // pred_check
          %p214 = pneg %p68
        $region14: #{tpu_custom_call.1} parent=11 // pred_check_branch
          %216 = sbr.rel (%p214) target = $region16
        $region15: #{tpu_custom_call.1} parent=11 // pred_region
          %s218 = ssub.s32 25088, 25088
          %219 = vsyncadd [#allocation6], %s218
          %s220 = sshll.u32 [#allocation5], 4
          %s221 = int_to_ptr.vmem [resolvable:$true] %s220
          %226 = dma.hbm_to_vmem [thread:$0]  %s1, 25088, %s221, [#allocation6], 256, 256, 16
        $region16: #{tpu_custom_call.1} parent=11 // pred_fallthru
          _
        // Predicated region
        $region17: #{tpu_custom_call.1} parent=11 // pred_check
          %p227 = pneg %p89
        $region18: #{tpu_custom_call.1} parent=11 // pred_check_branch
          %229 = sbr.rel (%p227) target = $region20
        $region19: #{tpu_custom_call.1} parent=11 // pred_region
          %s231 = ssub.s32 64, 64
          %232 = vsyncadd [#allocation6], %s231
          %s234 = sshll.u32 [#allocation7], 4
          %s235 = int_to_ptr.vmem [resolvable:$true] %s234
          %237 = dma.hbm_to_vmem [thread:$0]  %s2, 64, %s235, [#allocation6]
        $region20: #{tpu_custom_call.1} parent=11 // pred_fallthru
          _
        // Predicated region
        $region21: #{tpu_custom_call.1} parent=11 // pred_check
          %p238 = pneg %p110
        $region22: #{tpu_custom_call.1} parent=11 // pred_check_branch
          %240 = sbr.rel (%p238) target = $region24
        $region23: #{tpu_custom_call.1} parent=11 // pred_region
          %s242 = ssub.s32 16384, 16384
          %243 = vsyncadd [#allocation9], %s242
          %s244 = sshll.u32 [#allocation8], 4
          %s245 = int_to_ptr.vmem [resolvable:$true] %s244
          %250 = dma.hbm_to_vmem [thread:$0]  %s3, 16384, %s245, [#allocation9], 256, 256, 16
        $region24: #{tpu_custom_call.1} parent=11 // pred_fallthru
          _
        // Predicated region
        $region25: #{tpu_custom_call.1} parent=11 // pred_check
          %p251 = pneg %p131
        $region26: #{tpu_custom_call.1} parent=11 // pred_check_branch
          %253 = sbr.rel (%p251) target = $region28
        $region27: #{tpu_custom_call.1} parent=11 // pred_region
          _
        $region28: #{tpu_custom_call.1} parent=11 // pred_fallthru
          _
        // Predicated region
        $region29: #{tpu_custom_call.1} parent=11 // pred_check
          %p254 = pneg %p152
        $region30: #{tpu_custom_call.1} parent=11 // pred_check_branch
          %256 = sbr.rel (%p254) target = $region32
        $region31: #{tpu_custom_call.1} parent=11 // pred_region
          %s258 = ssub.s32 4096, 4096
          %259 = vsyncadd [#allocation9], %s258
          %s260 = sshll.u32 [#allocation10], 4
          %s261 = int_to_ptr.vmem [resolvable:$true] %s260
          %266 = dma.hbm_to_vmem [thread:$0]  %s5, 4096, %s261, [#allocation9], 64, 64, 4
        $region32: #{tpu_custom_call.1} parent=11 // pred_fallthru
          _
        // Predicated region
        $region33: #{tpu_custom_call.1} parent=11 // pred_check
          %p267 = pneg %p173
        $region34: #{tpu_custom_call.1} parent=11 // pred_check_branch
          %269 = sbr.rel (%p267) target = $region36
        $region35: #{tpu_custom_call.1} parent=11 // pred_region
          _
        $region36: #{tpu_custom_call.1} parent=11 // pred_fallthru
          _
      $region12: #{tpu_custom_call.1} parent=5 // pred_fallthru
        _
      %p270 = scmp.lt.s32.totalorder %s21, 2
      // Predicated region
      $region37: #{tpu_custom_call.1} parent=5 // pred_check
        %p271 = pneg %p270
      $region38: #{tpu_custom_call.1} parent=5 // pred_check_branch
        %273 = sbr.rel (%p271) target = $region40
      $region39: #{tpu_custom_call.1} parent=5 // pred_region
        // Predicated region
        $region41: #{tpu_custom_call.1} parent=39 // pred_check
          %p274 = pneg %p41
        $region42: #{tpu_custom_call.1} parent=39 // pred_check_branch
          %276 = sbr.rel (%p274) target = $region44
        $region43: #{tpu_custom_call.1} parent=39 // pred_region
          %s277 = sand.u32 %s31, 1
          %s278 = scalar_lea.sflag [#allocation3], %s277
          %s279 = sand.u32 %s31, 1
          %s280 = smul.addr %s279, 56
          %s281 = scalar_lea.vmem [#allocation2], %s280
          %s282 = smul.u32 2, %s21
          %s284 = ssub.s32 896, 896
          %285 = vsyncadd %s278, %s284
          %s286 = smul.addr %s282, 7
          %s287 = smul.addr %s286, 64
          %s288 = scalar_lea.hbm %s0, %s287
          %s289 = sshll.u32 %s281, 4
          %s290 = int_to_ptr.vmem [resolvable:$true] %s289
          %295 = dma.hbm_to_vmem [thread:$0]  %s288, 896, %s290, %s278, 448, 448, 28
        $region44: #{tpu_custom_call.1} parent=39 // pred_fallthru
          _
      $region40: #{tpu_custom_call.1} parent=5 // pred_fallthru
        _
      %p296 = scmp.le.s32.totalorder 1, %s21
      %p297 = scmp.lt.s32.totalorder %s21, 3
      %p298 = pnand %p296, %p297
      %p299 = pneg %p298
      // Predicated region
      $region45: #{tpu_custom_call.1} parent=5 // pred_check
        _
      $region46: #{tpu_custom_call.1} parent=5 // pred_check_branch
        %301 = sbr.rel (%p298) target = $region48
      $region47: #{tpu_custom_call.1} parent=5 // pred_region
        %s302 = ssub.s32 %s21, 1
        %s303 = sand.u32 %s34, 1
        %s304 = scalar_lea.sflag [#allocation3], %s303
        %s305 = sand.u32 %s34, 1
        %s306 = smul.addr %s305, 56
        %s307 = scalar_lea.vmem [#allocation2], %s306
        // Predicated region
        $region49: #{tpu_custom_call.1} parent=47 // pred_check
          %p308 = pneg %p47
        $region50: #{tpu_custom_call.1} parent=47 // pred_check_branch
          %310 = sbr.rel (%p308) target = $region52
        $region51: #{tpu_custom_call.1} parent=47 // pred_region
          %311 = dma.done %s304, 896
        $region52: #{tpu_custom_call.1} parent=47 // pred_fallthru
          _
        // Predicated region
        $region53: #{tpu_custom_call.1} parent=47 // pred_check
          %p312 = pneg %p68
        $region54: #{tpu_custom_call.1} parent=47 // pred_check_branch
          %314 = sbr.rel (%p312) target = $region56
        $region55: #{tpu_custom_call.1} parent=47 // pred_region
          %315 = dma.done [#allocation6], 25088
        $region56: #{tpu_custom_call.1} parent=47 // pred_fallthru
          _
        // Predicated region
        $region57: #{tpu_custom_call.1} parent=47 // pred_check
          %p316 = pneg %p89
        $region58: #{tpu_custom_call.1} parent=47 // pred_check_branch
          %318 = sbr.rel (%p316) target = $region60
        $region59: #{tpu_custom_call.1} parent=47 // pred_region
          %319 = dma.done [#allocation6], 64
        $region60: #{tpu_custom_call.1} parent=47 // pred_fallthru
          _
        // Predicated region
        $region61: #{tpu_custom_call.1} parent=47 // pred_check
          %p320 = pneg %p110
        $region62: #{tpu_custom_call.1} parent=47 // pred_check_branch
          %322 = sbr.rel (%p320) target = $region64
        $region63: #{tpu_custom_call.1} parent=47 // pred_region
          %323 = dma.done [#allocation9], 16384
        $region64: #{tpu_custom_call.1} parent=47 // pred_fallthru
          _
        // Predicated region
        $region65: #{tpu_custom_call.1} parent=47 // pred_check
          %p324 = pneg %p152
        $region66: #{tpu_custom_call.1} parent=47 // pred_check_branch
          %326 = sbr.rel (%p324) target = $region68
        $region67: #{tpu_custom_call.1} parent=47 // pred_region
          %327 = dma.done [#allocation9], 4096
        $region68: #{tpu_custom_call.1} parent=47 // pred_fallthru
          _
        %s328 = sand.u32 %s34, 1
        %s329 = scalar_lea.sflag [#allocation3], %s328
        %s330 = sand.u32 %s34, 1
        %s331 = smul.addr %s330, 56
        %s332 = scalar_lea.vmem [#allocation2], %s331
        %p333 = pneg %p47
        %p334 = pneg %p44
        %p335 = pneg %p68
        %p336 = pneg %p65
        %p337 = pneg %p89
        %p338 = pneg %p86
        %p339 = pneg %p110
        %p340 = pneg %p107
        %p341 = pneg %p131
        %p342 = pneg %p128
        %p343 = pneg %p152
        %p344 = pneg %p149
        %p345 = pneg %p173
        %p346 = pneg %p170
        %p347 = pneg %p199
        %p348 = pneg %p196
        %s349 = sand.u32 %s186, 1
        %s350 = scalar_lea.sflag [#allocation4], %s349
        %s351 = sand.u32 %s186, 1
        %s352 = smul.addr %s351, 16
        %s353 = scalar_lea.vmem [#allocation11], %s352
        %s354 = smul.u32 2, %s26
        %s355 = smul.u32 2, %s26
        %v357 = vld [vmem:[%s307] sm:$0xff]
        %v358 = vld [vmem:[%s307 + $0x8] sm:$0xff]
        %v359 = vld [vmem:[%s307 + $0x10] sm:$0xff]
        %v360 = vld [vmem:[%s307 + $0x18] sm:$0xf]
        %v361 = vld [vmem:[%s307 + $0x1c] sm:$0xff]
        %v362 = vld [vmem:[%s307 + $0x24] sm:$0xff]
        %v363 = vld [vmem:[%s307 + $0x2c] sm:$0xff]
        %v364 = vld [vmem:[%s307 + $0x34] sm:$0xf]
        %v365 = vld [vmem:[#allocation5] sm:$0xff]
        %v366 = vld [vmem:[#allocation5 + $0x8] sm:$0xff]
        %v367 = vld [vmem:[#allocation5 + $0x10] sm:$0xff]
        %v368 = vld [vmem:[#allocation5 + $0x18] sm:$0xff]
        %v369 = vld [vmem:[#allocation5 + $0x20] sm:$0xff]
        %v370 = vld [vmem:[#allocation5 + $0x28] sm:$0xff]
        %v371 = vld [vmem:[#allocation5 + $0x30] sm:$0xff]
        %v372 = vld [vmem:[#allocation5 + $0x38] sm:$0xff]
        %v373 = vld [vmem:[#allocation5 + $0x40] sm:$0xff]
        %v374 = vld [vmem:[#allocation5 + $0x48] sm:$0xff]
        %v375 = vld [vmem:[#allocation5 + $0x50] sm:$0xff]
        %v376 = vld [vmem:[#allocation5 + $0x58] sm:$0xff]
        %v377 = vld [vmem:[#allocation5 + $0x60] sm:$0xff]
        %v378 = vld [vmem:[#allocation5 + $0x68] sm:$0xff]
        %v379 = vld [vmem:[#allocation5 + $0x70] sm:$0xff]
        %v380 = vld [vmem:[#allocation5 + $0x78] sm:$0xff]
        %v381 = vld [vmem:[#allocation5 + $0x80] sm:$0xff]
        %v382 = vld [vmem:[#allocation5 + $0x88] sm:$0xff]
        %v383 = vld [vmem:[#allocation5 + $0x90] sm:$0xff]
        %v384 = vld [vmem:[#allocation5 + $0x98] sm:$0xff]
        %v385 = vld [vmem:[#allocation5 + $0xa0] sm:$0xff]
        %v386 = vld [vmem:[#allocation5 + $0xa8] sm:$0xff]
        %v387 = vld [vmem:[#allocation5 + $0xb0] sm:$0xff]
        %v388 = vld [vmem:[#allocation5 + $0xb8] sm:$0xff]
        %v389 = vld [vmem:[#allocation5 + $0xc0] sm:$0xff]
        %v390 = vld [vmem:[#allocation5 + $0xc8] sm:$0xff]
        %v391 = vld [vmem:[#allocation5 + $0xd0] sm:$0xff]
        %v392 = vld [vmem:[#allocation5 + $0xd8] sm:$0xff]
        %v393 = vld [vmem:[#allocation5 + $0xe0] sm:$0xff]
        %v394 = vld [vmem:[#allocation5 + $0xe8] sm:$0xff]
        %v395 = vld [vmem:[#allocation5 + $0xf0] sm:$0xff]
        %v396 = vld [vmem:[#allocation5 + $0xf8] sm:$0xff]
        %v397 = vld [vmem:[#allocation5 + $0x100] sm:$0xff]
        %v398 = vld [vmem:[#allocation5 + $0x108] sm:$0xff]
        %v399 = vld [vmem:[#allocation5 + $0x110] sm:$0xff]
        %v400 = vld [vmem:[#allocation5 + $0x118] sm:$0xff]
        %v401 = vld [vmem:[#allocation5 + $0x120] sm:$0xff]
        %v402 = vld [vmem:[#allocation5 + $0x128] sm:$0xff]
        %v403 = vld [vmem:[#allocation5 + $0x130] sm:$0xff]
        %v404 = vld [vmem:[#allocation5 + $0x138] sm:$0xff]
        %v405 = vld [vmem:[#allocation5 + $0x140] sm:$0xff]
        %v406 = vld [vmem:[#allocation5 + $0x148] sm:$0xff]
        %v407 = vld [vmem:[#allocation5 + $0x150] sm:$0xff]
        %v408 = vld [vmem:[#allocation5 + $0x158] sm:$0xff]
        %v409 = vld [vmem:[#allocation5 + $0x160] sm:$0xff]
        %v410 = vld [vmem:[#allocation5 + $0x168] sm:$0xff]
        %v411 = vld [vmem:[#allocation5 + $0x170] sm:$0xff]
        %v412 = vld [vmem:[#allocation5 + $0x178] sm:$0xff]
        %v413 = vld [vmem:[#allocation5 + $0x180] sm:$0xff]
        %v414 = vld [vmem:[#allocation5 + $0x188] sm:$0xff]
        %v415 = vld [vmem:[#allocation5 + $0x190] sm:$0xff]
        %v416 = vld [vmem:[#allocation5 + $0x198] sm:$0xff]
        %v417 = vld [vmem:[#allocation5 + $0x1a0] sm:$0xff]
        %v418 = vld [vmem:[#allocation5 + $0x1a8] sm:$0xff]
        %v419 = vld [vmem:[#allocation5 + $0x1b0] sm:$0xff]
        %v420 = vld [vmem:[#allocation5 + $0x1b8] sm:$0xff]
        %v421 = vld [vmem:[#allocation5 + $0x1c0] sm:$0xff]
        %v422 = vld [vmem:[#allocation5 + $0x1c8] sm:$0xff]
        %v423 = vld [vmem:[#allocation5 + $0x1d0] sm:$0xff]
        %v424 = vld [vmem:[#allocation5 + $0x1d8] sm:$0xff]
        %v425 = vld [vmem:[#allocation5 + $0x1e0] sm:$0xff]
        %v426 = vld [vmem:[#allocation5 + $0x1e8] sm:$0xff]
        %v427 = vld [vmem:[#allocation5 + $0x1f0] sm:$0xff]
        %v428 = vld [vmem:[#allocation5 + $0x1f8] sm:$0xff]
        %v429 = vld [vmem:[#allocation5 + $0x200] sm:$0xff]
        %v430 = vld [vmem:[#allocation5 + $0x208] sm:$0xff]
        %v431 = vld [vmem:[#allocation5 + $0x210] sm:$0xff]
        %v432 = vld [vmem:[#allocation5 + $0x218] sm:$0xff]
        %v433 = vld [vmem:[#allocation5 + $0x220] sm:$0xff]
        %v434 = vld [vmem:[#allocation5 + $0x228] sm:$0xff]
        %v435 = vld [vmem:[#allocation5 + $0x230] sm:$0xff]
        %v436 = vld [vmem:[#allocation5 + $0x238] sm:$0xff]
        %v437 = vld [vmem:[#allocation5 + $0x240] sm:$0xff]
        %v438 = vld [vmem:[#allocation5 + $0x248] sm:$0xff]
        %v439 = vld [vmem:[#allocation5 + $0x250] sm:$0xff]
        %v440 = vld [vmem:[#allocation5 + $0x258] sm:$0xff]
        %v441 = vld [vmem:[#allocation5 + $0x260] sm:$0xff]
        %v442 = vld [vmem:[#allocation5 + $0x268] sm:$0xff]
        %v443 = vld [vmem:[#allocation5 + $0x270] sm:$0xff]
        %v444 = vld [vmem:[#allocation5 + $0x278] sm:$0xff]
        %v445 = vld [vmem:[#allocation5 + $0x280] sm:$0xff]
        %v446 = vld [vmem:[#allocation5 + $0x288] sm:$0xff]
        %v447 = vld [vmem:[#allocation5 + $0x290] sm:$0xff]
        %v448 = vld [vmem:[#allocation5 + $0x298] sm:$0xff]
        %v449 = vld [vmem:[#allocation5 + $0x2a0] sm:$0xff]
        %v450 = vld [vmem:[#allocation5 + $0x2a8] sm:$0xff]
        %v451 = vld [vmem:[#allocation5 + $0x2b0] sm:$0xff]
        %v452 = vld [vmem:[#allocation5 + $0x2b8] sm:$0xff]
        %v453 = vld [vmem:[#allocation5 + $0x2c0] sm:$0xff]
        %v454 = vld [vmem:[#allocation5 + $0x2c8] sm:$0xff]
        %v455 = vld [vmem:[#allocation5 + $0x2d0] sm:$0xff]
        %v456 = vld [vmem:[#allocation5 + $0x2d8] sm:$0xff]
        %v457 = vld [vmem:[#allocation5 + $0x2e0] sm:$0xff]
        %v458 = vld [vmem:[#allocation5 + $0x2e8] sm:$0xff]
        %v459 = vld [vmem:[#allocation5 + $0x2f0] sm:$0xff]
        %v460 = vld [vmem:[#allocation5 + $0x2f8] sm:$0xff]
        %v461 = vld [vmem:[#allocation5 + $0x300] sm:$0xff]
        %v462 = vld [vmem:[#allocation5 + $0x308] sm:$0xff]
        %v463 = vld [vmem:[#allocation5 + $0x310] sm:$0xff]
        %v464 = vld [vmem:[#allocation5 + $0x318] sm:$0xff]
        %v465 = vld [vmem:[#allocation5 + $0x320] sm:$0xff]
        %v466 = vld [vmem:[#allocation5 + $0x328] sm:$0xff]
        %v467 = vld [vmem:[#allocation5 + $0x330] sm:$0xff]
        %v468 = vld [vmem:[#allocation5 + $0x338] sm:$0xff]
        %v469 = vld [vmem:[#allocation5 + $0x340] sm:$0xff]
        %v470 = vld [vmem:[#allocation5 + $0x348] sm:$0xff]
        %v471 = vld [vmem:[#allocation5 + $0x350] sm:$0xff]
        %v472 = vld [vmem:[#allocation5 + $0x358] sm:$0xff]
        %v473 = vld [vmem:[#allocation5 + $0x360] sm:$0xff]
        %v474 = vld [vmem:[#allocation5 + $0x368] sm:$0xff]
        %v475 = vld [vmem:[#allocation5 + $0x370] sm:$0xff]
        %v476 = vld [vmem:[#allocation5 + $0x378] sm:$0xff]
        %v477 = vld [vmem:[#allocation5 + $0x380] sm:$0xff]
        %v478 = vld [vmem:[#allocation5 + $0x388] sm:$0xff]
        %v479 = vld [vmem:[#allocation5 + $0x390] sm:$0xff]
        %v480 = vld [vmem:[#allocation5 + $0x398] sm:$0xff]
        %v481 = vld [vmem:[#allocation5 + $0x3a0] sm:$0xff]
        %v482 = vld [vmem:[#allocation5 + $0x3a8] sm:$0xff]
        %v483 = vld [vmem:[#allocation5 + $0x3b0] sm:$0xff]
        %v484 = vld [vmem:[#allocation5 + $0x3b8] sm:$0xff]
        %v485 = vld [vmem:[#allocation5 + $0x3c0] sm:$0xff]
        %v486 = vld [vmem:[#allocation5 + $0x3c8] sm:$0xff]
        %v487 = vld [vmem:[#allocation5 + $0x3d0] sm:$0xff]
        %v488 = vld [vmem:[#allocation5 + $0x3d8] sm:$0xff]
        %v489 = vld [vmem:[#allocation5 + $0x3e0] sm:$0xff]
        %v490 = vld [vmem:[#allocation5 + $0x3e8] sm:$0xff]
        %v491 = vld [vmem:[#allocation5 + $0x3f0] sm:$0xff]
        %v492 = vld [vmem:[#allocation5 + $0x3f8] sm:$0xff]
        %v493 = vld [vmem:[#allocation5 + $0x400] sm:$0xff]
        %v494 = vld [vmem:[#allocation5 + $0x408] sm:$0xff]
        %v495 = vld [vmem:[#allocation5 + $0x410] sm:$0xff]
        %v496 = vld [vmem:[#allocation5 + $0x418] sm:$0xff]
        %v497 = vld [vmem:[#allocation5 + $0x420] sm:$0xff]
        %v498 = vld [vmem:[#allocation5 + $0x428] sm:$0xff]
        %v499 = vld [vmem:[#allocation5 + $0x430] sm:$0xff]
        %v500 = vld [vmem:[#allocation5 + $0x438] sm:$0xff]
        %v501 = vld [vmem:[#allocation5 + $0x440] sm:$0xff]
        %v502 = vld [vmem:[#allocation5 + $0x448] sm:$0xff]
        %v503 = vld [vmem:[#allocation5 + $0x450] sm:$0xff]
        %v504 = vld [vmem:[#allocation5 + $0x458] sm:$0xff]
        %v505 = vld [vmem:[#allocation5 + $0x460] sm:$0xff]
        %v506 = vld [vmem:[#allocation5 + $0x468] sm:$0xff]
        %v507 = vld [vmem:[#allocation5 + $0x470] sm:$0xff]
        %v508 = vld [vmem:[#allocation5 + $0x478] sm:$0xff]
        %v509 = vld [vmem:[#allocation5 + $0x480] sm:$0xff]
        %v510 = vld [vmem:[#allocation5 + $0x488] sm:$0xff]
        %v511 = vld [vmem:[#allocation5 + $0x490] sm:$0xff]
        %v512 = vld [vmem:[#allocation5 + $0x498] sm:$0xff]
        %v513 = vld [vmem:[#allocation5 + $0x4a0] sm:$0xff]
        %v514 = vld [vmem:[#allocation5 + $0x4a8] sm:$0xff]
        %v515 = vld [vmem:[#allocation5 + $0x4b0] sm:$0xff]
        %v516 = vld [vmem:[#allocation5 + $0x4b8] sm:$0xff]
        %v517 = vld [vmem:[#allocation5 + $0x4c0] sm:$0xff]
        %v518 = vld [vmem:[#allocation5 + $0x4c8] sm:$0xff]
        %v519 = vld [vmem:[#allocation5 + $0x4d0] sm:$0xff]
        %v520 = vld [vmem:[#allocation5 + $0x4d8] sm:$0xff]
        %v521 = vld [vmem:[#allocation5 + $0x4e0] sm:$0xff]
        %v522 = vld [vmem:[#allocation5 + $0x4e8] sm:$0xff]
        %v523 = vld [vmem:[#allocation5 + $0x4f0] sm:$0xff]
        %v524 = vld [vmem:[#allocation5 + $0x4f8] sm:$0xff]
        %v525 = vld [vmem:[#allocation5 + $0x500] sm:$0xff]
        %v526 = vld [vmem:[#allocation5 + $0x508] sm:$0xff]
        %v527 = vld [vmem:[#allocation5 + $0x510] sm:$0xff]
        %v528 = vld [vmem:[#allocation5 + $0x518] sm:$0xff]
        %v529 = vld [vmem:[#allocation5 + $0x520] sm:$0xff]
        %v530 = vld [vmem:[#allocation5 + $0x528] sm:$0xff]
        %v531 = vld [vmem:[#allocation5 + $0x530] sm:$0xff]
        %v532 = vld [vmem:[#allocation5 + $0x538] sm:$0xff]
        %v533 = vld [vmem:[#allocation5 + $0x540] sm:$0xff]
        %v534 = vld [vmem:[#allocation5 + $0x548] sm:$0xff]
        %v535 = vld [vmem:[#allocation5 + $0x550] sm:$0xff]
        %v536 = vld [vmem:[#allocation5 + $0x558] sm:$0xff]
        %v537 = vld [vmem:[#allocation5 + $0x560] sm:$0xff]
        %v538 = vld [vmem:[#allocation5 + $0x568] sm:$0xff]
        %v539 = vld [vmem:[#allocation5 + $0x570] sm:$0xff]
        %v540 = vld [vmem:[#allocation5 + $0x578] sm:$0xff]
        %v541 = vld [vmem:[#allocation5 + $0x580] sm:$0xff]
        %v542 = vld [vmem:[#allocation5 + $0x588] sm:$0xff]
        %v543 = vld [vmem:[#allocation5 + $0x590] sm:$0xff]
        %v544 = vld [vmem:[#allocation5 + $0x598] sm:$0xff]
        %v545 = vld [vmem:[#allocation5 + $0x5a0] sm:$0xff]
        %v546 = vld [vmem:[#allocation5 + $0x5a8] sm:$0xff]
        %v547 = vld [vmem:[#allocation5 + $0x5b0] sm:$0xff]
        %v548 = vld [vmem:[#allocation5 + $0x5b8] sm:$0xff]
        %v549 = vld [vmem:[#allocation5 + $0x5c0] sm:$0xff]
        %v550 = vld [vmem:[#allocation5 + $0x5c8] sm:$0xff]
        %v551 = vld [vmem:[#allocation5 + $0x5d0] sm:$0xff]
        %v552 = vld [vmem:[#allocation5 + $0x5d8] sm:$0xff]
        %v553 = vld [vmem:[#allocation5 + $0x5e0] sm:$0xff]
        %v554 = vld [vmem:[#allocation5 + $0x5e8] sm:$0xff]
        %v555 = vld [vmem:[#allocation5 + $0x5f0] sm:$0xff]
        %v556 = vld [vmem:[#allocation5 + $0x5f8] sm:$0xff]
        %v557 = vld [vmem:[#allocation5 + $0x600] sm:$0xff]
        %v558 = vld [vmem:[#allocation5 + $0x608] sm:$0xff]
        %v559 = vld [vmem:[#allocation5 + $0x610] sm:$0xff]
        %v560 = vld [vmem:[#allocation5 + $0x618] sm:$0xff]
        %v561 = vld [vmem:[#allocation7] sm:$0xf]
        %v563 = vlaneseq
        %v564 = vshrl.u32 %v563, 7
        %v565 = vsub.s32 0, %v564
        %v566 = vrot.slane %v561, %v565
        %v567 = vlaneseq
        %v568 = vshrl.u32 %v567, 7
        %v569 = vsub.s32 1, %v568
        %v570 = vrot.slane %v561, %v569
        %v571 = vlaneseq
        %v572 = vshrl.u32 %v571, 7
        %v573 = vsub.s32 2, %v572
        %v574 = vrot.slane %v561, %v573
        %v575 = vlaneseq
        %v576 = vshrl.u32 %v575, 7
        %v577 = vsub.s32 3, %v576
        %v578 = vrot.slane %v561, %v577
        %v591 = vunpack.c.l.b16 %v357
        %v592 = vunpack.c.h.b16 %v357
        %v593 = vunpack.c.l.b16 %v358
        %v594 = vunpack.c.h.b16 %v358
        %v595 = vunpack.c.l.b16 %v359
        %v596 = vunpack.c.h.b16 %v359
        %v597 = vunpack.c.l.b16 %v360
        %v598 = vunpack.c.l.b16 %v361
        %v599 = vunpack.c.h.b16 %v361
        %v600 = vunpack.c.l.b16 %v362
        %v601 = vunpack.c.h.b16 %v362
        %v602 = vunpack.c.l.b16 %v363
        %v603 = vunpack.c.h.b16 %v363
        %v604 = vunpack.c.l.b16 %v364
        %v605 = vpack.c.b16 %v598, %v591
        %v606 = vpack.c.b16 %v599, %v592
        %v607 = vpack.c.b16 %v600, %v593
        %v608 = vpack.c.b16 %v601, %v594
        %v609 = vpack.c.b16 %v602, %v595
        %v610 = vpack.c.b16 %v603, %v596
        %v611 = vpack.c.b16 %v604, %v597
        %v814 = vunpack.c.l.b16 %v365
        %v815 = vunpack.c.h.b16 %v365
        %v816 = vunpack.c.l.b16 %v366
        %v817 = vunpack.c.h.b16 %v366
        %v818 = vunpack.c.l.b16 %v367
        %v819 = vunpack.c.h.b16 %v367
        %v820 = vunpack.c.l.b16 %v368
        %v821 = vunpack.c.h.b16 %v368
        %v822 = vunpack.c.l.b16 %v369
        %v823 = vunpack.c.h.b16 %v369
        %v824 = vunpack.c.l.b16 %v370
        %v825 = vunpack.c.h.b16 %v370
        %v826 = vunpack.c.l.b16 %v371
        %v827 = vunpack.c.h.b16 %v371
        %v828 = vunpack.c.l.b16 %v372
        %v829 = vunpack.c.h.b16 %v372
        %v830 = vunpack.c.l.b16 %v373
        %v831 = vunpack.c.h.b16 %v373
        %v832 = vunpack.c.l.b16 %v374
        %v833 = vunpack.c.h.b16 %v374
        %v834 = vunpack.c.l.b16 %v375
        %v835 = vunpack.c.h.b16 %v375
        %v836 = vunpack.c.l.b16 %v376
        %v837 = vunpack.c.h.b16 %v376
        %v838 = vunpack.c.l.b16 %v377
        %v839 = vunpack.c.h.b16 %v377
        %v840 = vunpack.c.l.b16 %v378
        %v841 = vunpack.c.h.b16 %v378
        %v842 = vunpack.c.l.b16 %v379
        %v843 = vunpack.c.h.b16 %v379
        %v844 = vunpack.c.l.b16 %v380
        %v845 = vunpack.c.h.b16 %v380
        %v846 = vunpack.c.l.b16 %v381
        %v847 = vunpack.c.h.b16 %v381
        %v848 = vunpack.c.l.b16 %v382
        %v849 = vunpack.c.h.b16 %v382
        %v850 = vunpack.c.l.b16 %v383
        %v851 = vunpack.c.h.b16 %v383
        %v852 = vunpack.c.l.b16 %v384
        %v853 = vunpack.c.h.b16 %v384
        %v854 = vunpack.c.l.b16 %v385
        %v855 = vunpack.c.h.b16 %v385
        %v856 = vunpack.c.l.b16 %v386
        %v857 = vunpack.c.h.b16 %v386
        %v858 = vunpack.c.l.b16 %v387
        %v859 = vunpack.c.h.b16 %v387
        %v860 = vunpack.c.l.b16 %v388
        %v861 = vunpack.c.h.b16 %v388
        %v862 = vunpack.c.l.b16 %v389
        %v863 = vunpack.c.h.b16 %v389
        %v864 = vunpack.c.l.b16 %v390
        %v865 = vunpack.c.h.b16 %v390
        %v866 = vunpack.c.l.b16 %v391
        %v867 = vunpack.c.h.b16 %v391
        %v868 = vunpack.c.l.b16 %v392
        %v869 = vunpack.c.h.b16 %v392
        %v870 = vunpack.c.l.b16 %v393
        %v871 = vunpack.c.h.b16 %v393
        %v872 = vunpack.c.l.b16 %v394
        %v873 = vunpack.c.h.b16 %v394
        %v874 = vunpack.c.l.b16 %v395
        %v875 = vunpack.c.h.b16 %v395
        %v876 = vunpack.c.l.b16 %v396
        %v877 = vunpack.c.h.b16 %v396
        %v878 = vunpack.c.l.b16 %v397
        %v879 = vunpack.c.h.b16 %v397
        %v880 = vunpack.c.l.b16 %v398
        %v881 = vunpack.c.h.b16 %v398
        %v882 = vunpack.c.l.b16 %v399
        %v883 = vunpack.c.h.b16 %v399
        %v884 = vunpack.c.l.b16 %v400
        %v885 = vunpack.c.h.b16 %v400
        %v886 = vunpack.c.l.b16 %v401
        %v887 = vunpack.c.h.b16 %v401
        %v888 = vunpack.c.l.b16 %v402
        %v889 = vunpack.c.h.b16 %v402
        %v890 = vunpack.c.l.b16 %v403
        %v891 = vunpack.c.h.b16 %v403
        %v892 = vunpack.c.l.b16 %v404
        %v893 = vunpack.c.h.b16 %v404
        %v894 = vunpack.c.l.b16 %v405
        %v895 = vunpack.c.h.b16 %v405
        %v896 = vunpack.c.l.b16 %v406
        %v897 = vunpack.c.h.b16 %v406
        %v898 = vunpack.c.l.b16 %v407
        %v899 = vunpack.c.h.b16 %v407
        %v900 = vunpack.c.l.b16 %v408
        %v901 = vunpack.c.h.b16 %v408
        %v902 = vunpack.c.l.b16 %v409
        %v903 = vunpack.c.h.b16 %v409
        %v904 = vunpack.c.l.b16 %v410
        %v905 = vunpack.c.h.b16 %v410
        %v906 = vunpack.c.l.b16 %v411
        %v907 = vunpack.c.h.b16 %v411
        %v908 = vunpack.c.l.b16 %v412
        %v909 = vunpack.c.h.b16 %v412
        %v910 = vunpack.c.l.b16 %v413
        %v911 = vunpack.c.h.b16 %v413
        %v912 = vunpack.c.l.b16 %v414
        %v913 = vunpack.c.h.b16 %v414
        %v914 = vunpack.c.l.b16 %v415
        %v915 = vunpack.c.h.b16 %v415
        %v916 = vunpack.c.l.b16 %v416
        %v917 = vunpack.c.h.b16 %v416
        %v918 = vunpack.c.l.b16 %v417
        %v919 = vunpack.c.h.b16 %v417
        %v920 = vunpack.c.l.b16 %v418
        %v921 = vunpack.c.h.b16 %v418
        %v922 = vunpack.c.l.b16 %v419
        %v923 = vunpack.c.h.b16 %v419
        %v924 = vunpack.c.l.b16 %v420
        %v925 = vunpack.c.h.b16 %v420
        %v926 = vunpack.c.l.b16 %v421
        %v927 = vunpack.c.h.b16 %v421
        %v928 = vunpack.c.l.b16 %v422
        %v929 = vunpack.c.h.b16 %v422
        %v930 = vunpack.c.l.b16 %v423
        %v931 = vunpack.c.h.b16 %v423
        %v932 = vunpack.c.l.b16 %v424
        %v933 = vunpack.c.h.b16 %v424
        %v934 = vunpack.c.l.b16 %v425
        %v935 = vunpack.c.h.b16 %v425
        %v936 = vunpack.c.l.b16 %v426
        %v937 = vunpack.c.h.b16 %v426
        %v938 = vunpack.c.l.b16 %v427
        %v939 = vunpack.c.h.b16 %v427
        %v940 = vunpack.c.l.b16 %v428
        %v941 = vunpack.c.h.b16 %v428
        %v942 = vunpack.c.l.b16 %v429
        %v943 = vunpack.c.h.b16 %v429
        %v944 = vunpack.c.l.b16 %v430
        %v945 = vunpack.c.h.b16 %v430
        %v946 = vunpack.c.l.b16 %v431
        %v947 = vunpack.c.h.b16 %v431
        %v948 = vunpack.c.l.b16 %v432
        %v949 = vunpack.c.h.b16 %v432
        %v950 = vunpack.c.l.b16 %v433
        %v951 = vunpack.c.h.b16 %v433
        %v952 = vunpack.c.l.b16 %v434
        %v953 = vunpack.c.h.b16 %v434
        %v954 = vunpack.c.l.b16 %v435
        %v955 = vunpack.c.h.b16 %v435
        %v956 = vunpack.c.l.b16 %v436
        %v957 = vunpack.c.h.b16 %v436
        %v958 = vunpack.c.l.b16 %v437
        %v959 = vunpack.c.h.b16 %v437
        %v960 = vunpack.c.l.b16 %v438
        %v961 = vunpack.c.h.b16 %v438
        %v962 = vunpack.c.l.b16 %v439
        %v963 = vunpack.c.h.b16 %v439
        %v964 = vunpack.c.l.b16 %v440
        %v965 = vunpack.c.h.b16 %v440
        %v966 = vunpack.c.l.b16 %v441
        %v967 = vunpack.c.h.b16 %v441
        %v968 = vunpack.c.l.b16 %v442
        %v969 = vunpack.c.h.b16 %v442
        %v970 = vunpack.c.l.b16 %v443
        %v971 = vunpack.c.h.b16 %v443
        %v972 = vunpack.c.l.b16 %v444
        %v973 = vunpack.c.h.b16 %v444
        %v974 = vunpack.c.l.b16 %v445
        %v975 = vunpack.c.h.b16 %v445
        %v976 = vunpack.c.l.b16 %v446
        %v977 = vunpack.c.h.b16 %v446
        %v978 = vunpack.c.l.b16 %v447
        %v979 = vunpack.c.h.b16 %v447
        %v980 = vunpack.c.l.b16 %v448
        %v981 = vunpack.c.h.b16 %v448
        %v982 = vunpack.c.l.b16 %v449
        %v983 = vunpack.c.h.b16 %v449
        %v984 = vunpack.c.l.b16 %v450
        %v985 = vunpack.c.h.b16 %v450
        %v986 = vunpack.c.l.b16 %v451
        %v987 = vunpack.c.h.b16 %v451
        %v988 = vunpack.c.l.b16 %v452
        %v989 = vunpack.c.h.b16 %v452
        %v990 = vunpack.c.l.b16 %v453
        %v991 = vunpack.c.h.b16 %v453
        %v992 = vunpack.c.l.b16 %v454
        %v993 = vunpack.c.h.b16 %v454
        %v994 = vunpack.c.l.b16 %v455
        %v995 = vunpack.c.h.b16 %v455
        %v996 = vunpack.c.l.b16 %v456
        %v997 = vunpack.c.h.b16 %v456
        %v998 = vunpack.c.l.b16 %v457
        %v999 = vunpack.c.h.b16 %v457
        %v1000 = vunpack.c.l.b16 %v458
        %v1001 = vunpack.c.h.b16 %v458
        %v1002 = vunpack.c.l.b16 %v459
        %v1003 = vunpack.c.h.b16 %v459
        %v1004 = vunpack.c.l.b16 %v460
        %v1005 = vunpack.c.h.b16 %v460
        %v1006 = vunpack.c.l.b16 %v461
        %v1007 = vunpack.c.h.b16 %v461
        %v1008 = vunpack.c.l.b16 %v462
        %v1009 = vunpack.c.h.b16 %v462
        %v1010 = vunpack.c.l.b16 %v463
        %v1011 = vunpack.c.h.b16 %v463
        %v1012 = vunpack.c.l.b16 %v464
        %v1013 = vunpack.c.h.b16 %v464
        %v1014 = vunpack.c.l.b16 %v465
        %v1015 = vunpack.c.h.b16 %v465
        %v1016 = vunpack.c.l.b16 %v466
        %v1017 = vunpack.c.h.b16 %v466
        %v1018 = vunpack.c.l.b16 %v467
        %v1019 = vunpack.c.h.b16 %v467
        %v1020 = vunpack.c.l.b16 %v468
        %v1021 = vunpack.c.h.b16 %v468
        %v1022 = vunpack.c.l.b16 %v469
        %v1023 = vunpack.c.h.b16 %v469
        %v1024 = vunpack.c.l.b16 %v470
        %v1025 = vunpack.c.h.b16 %v470
        %v1026 = vunpack.c.l.b16 %v471
        %v1027 = vunpack.c.h.b16 %v471
        %v1028 = vunpack.c.l.b16 %v472
        %v1029 = vunpack.c.h.b16 %v472
        %v1030 = vunpack.c.l.b16 %v473
        %v1031 = vunpack.c.h.b16 %v473
        %v1032 = vunpack.c.l.b16 %v474
        %v1033 = vunpack.c.h.b16 %v474
        %v1034 = vunpack.c.l.b16 %v475
        %v1035 = vunpack.c.h.b16 %v475
        %v1036 = vunpack.c.l.b16 %v476
        %v1037 = vunpack.c.h.b16 %v476
        %v1038 = vunpack.c.l.b16 %v477
        %v1039 = vunpack.c.h.b16 %v477
        %v1040 = vunpack.c.l.b16 %v478
        %v1041 = vunpack.c.h.b16 %v478
        %v1042 = vunpack.c.l.b16 %v479
        %v1043 = vunpack.c.h.b16 %v479
        %v1044 = vunpack.c.l.b16 %v480
        %v1045 = vunpack.c.h.b16 %v480
        %v1046 = vunpack.c.l.b16 %v481
        %v1047 = vunpack.c.h.b16 %v481
        %v1048 = vunpack.c.l.b16 %v482
        %v1049 = vunpack.c.h.b16 %v482
        %v1050 = vunpack.c.l.b16 %v483
        %v1051 = vunpack.c.h.b16 %v483
        %v1052 = vunpack.c.l.b16 %v484
        %v1053 = vunpack.c.h.b16 %v484
        %v1054 = vunpack.c.l.b16 %v485
        %v1055 = vunpack.c.h.b16 %v485
        %v1056 = vunpack.c.l.b16 %v486
        %v1057 = vunpack.c.h.b16 %v486
        %v1058 = vunpack.c.l.b16 %v487
        %v1059 = vunpack.c.h.b16 %v487
        %v1060 = vunpack.c.l.b16 %v488
        %v1061 = vunpack.c.h.b16 %v488
        %v1062 = vunpack.c.l.b16 %v489
        %v1063 = vunpack.c.h.b16 %v489
        %v1064 = vunpack.c.l.b16 %v490
        %v1065 = vunpack.c.h.b16 %v490
        %v1066 = vunpack.c.l.b16 %v491
        %v1067 = vunpack.c.h.b16 %v491
        %v1068 = vunpack.c.l.b16 %v492
        %v1069 = vunpack.c.h.b16 %v492
        %v1070 = vunpack.c.l.b16 %v493
        %v1071 = vunpack.c.h.b16 %v493
        %v1072 = vunpack.c.l.b16 %v494
        %v1073 = vunpack.c.h.b16 %v494
        %v1074 = vunpack.c.l.b16 %v495
        %v1075 = vunpack.c.h.b16 %v495
        %v1076 = vunpack.c.l.b16 %v496
        %v1077 = vunpack.c.h.b16 %v496
        %v1078 = vunpack.c.l.b16 %v497
        %v1079 = vunpack.c.h.b16 %v497
        %v1080 = vunpack.c.l.b16 %v498
        %v1081 = vunpack.c.h.b16 %v498
        %v1082 = vunpack.c.l.b16 %v499
        %v1083 = vunpack.c.h.b16 %v499
        %v1084 = vunpack.c.l.b16 %v500
        %v1085 = vunpack.c.h.b16 %v500
        %v1086 = vunpack.c.l.b16 %v501
        %v1087 = vunpack.c.h.b16 %v501
        %v1088 = vunpack.c.l.b16 %v502
        %v1089 = vunpack.c.h.b16 %v502
        %v1090 = vunpack.c.l.b16 %v503
        %v1091 = vunpack.c.h.b16 %v503
        %v1092 = vunpack.c.l.b16 %v504
        %v1093 = vunpack.c.h.b16 %v504
        %v1094 = vunpack.c.l.b16 %v505
        %v1095 = vunpack.c.h.b16 %v505
        %v1096 = vunpack.c.l.b16 %v506
        %v1097 = vunpack.c.h.b16 %v506
        %v1098 = vunpack.c.l.b16 %v507
        %v1099 = vunpack.c.h.b16 %v507
        %v1100 = vunpack.c.l.b16 %v508
        %v1101 = vunpack.c.h.b16 %v508
        %v1102 = vunpack.c.l.b16 %v509
        %v1103 = vunpack.c.h.b16 %v509
        %v1104 = vunpack.c.l.b16 %v510
        %v1105 = vunpack.c.h.b16 %v510
        %v1106 = vunpack.c.l.b16 %v511
        %v1107 = vunpack.c.h.b16 %v511
        %v1108 = vunpack.c.l.b16 %v512
        %v1109 = vunpack.c.h.b16 %v512
        %v1110 = vunpack.c.l.b16 %v513
        %v1111 = vunpack.c.h.b16 %v513
        %v1112 = vunpack.c.l.b16 %v514
        %v1113 = vunpack.c.h.b16 %v514
        %v1114 = vunpack.c.l.b16 %v515
        %v1115 = vunpack.c.h.b16 %v515
        %v1116 = vunpack.c.l.b16 %v516
        %v1117 = vunpack.c.h.b16 %v516
        %v1118 = vunpack.c.l.b16 %v517
        %v1119 = vunpack.c.h.b16 %v517
        %v1120 = vunpack.c.l.b16 %v518
        %v1121 = vunpack.c.h.b16 %v518
        %v1122 = vunpack.c.l.b16 %v519
        %v1123 = vunpack.c.h.b16 %v519
        %v1124 = vunpack.c.l.b16 %v520
        %v1125 = vunpack.c.h.b16 %v520
        %v1126 = vunpack.c.l.b16 %v521
        %v1127 = vunpack.c.h.b16 %v521
        %v1128 = vunpack.c.l.b16 %v522
        %v1129 = vunpack.c.h.b16 %v522
        %v1130 = vunpack.c.l.b16 %v523
        %v1131 = vunpack.c.h.b16 %v523
        %v1132 = vunpack.c.l.b16 %v524
        %v1133 = vunpack.c.h.b16 %v524
        %v1134 = vunpack.c.l.b16 %v525
        %v1135 = vunpack.c.h.b16 %v525
        %v1136 = vunpack.c.l.b16 %v526
        %v1137 = vunpack.c.h.b16 %v526
        %v1138 = vunpack.c.l.b16 %v527
        %v1139 = vunpack.c.h.b16 %v527
        %v1140 = vunpack.c.l.b16 %v528
        %v1141 = vunpack.c.h.b16 %v528
        %v1142 = vunpack.c.l.b16 %v529
        %v1143 = vunpack.c.h.b16 %v529
        %v1144 = vunpack.c.l.b16 %v530
        %v1145 = vunpack.c.h.b16 %v530
        %v1146 = vunpack.c.l.b16 %v531
        %v1147 = vunpack.c.h.b16 %v531
        %v1148 = vunpack.c.l.b16 %v532
        %v1149 = vunpack.c.h.b16 %v532
        %v1150 = vunpack.c.l.b16 %v533
        %v1151 = vunpack.c.h.b16 %v533
        %v1152 = vunpack.c.l.b16 %v534
        %v1153 = vunpack.c.h.b16 %v534
        %v1154 = vunpack.c.l.b16 %v535
        %v1155 = vunpack.c.h.b16 %v535
        %v1156 = vunpack.c.l.b16 %v536
        %v1157 = vunpack.c.h.b16 %v536
        %v1158 = vunpack.c.l.b16 %v537
        %v1159 = vunpack.c.h.b16 %v537
        %v1160 = vunpack.c.l.b16 %v538
        %v1161 = vunpack.c.h.b16 %v538
        %v1162 = vunpack.c.l.b16 %v539
        %v1163 = vunpack.c.h.b16 %v539
        %v1164 = vunpack.c.l.b16 %v540
        %v1165 = vunpack.c.h.b16 %v540
        %v1166 = vunpack.c.l.b16 %v541
        %v1167 = vunpack.c.h.b16 %v541
        %v1168 = vunpack.c.l.b16 %v542
        %v1169 = vunpack.c.h.b16 %v542
        %v1170 = vunpack.c.l.b16 %v543
        %v1171 = vunpack.c.h.b16 %v543
        %v1172 = vunpack.c.l.b16 %v544
        %v1173 = vunpack.c.h.b16 %v544
        %v1174 = vunpack.c.l.b16 %v545
        %v1175 = vunpack.c.h.b16 %v545
        %v1176 = vunpack.c.l.b16 %v546
        %v1177 = vunpack.c.h.b16 %v546
        %v1178 = vunpack.c.l.b16 %v547
        %v1179 = vunpack.c.h.b16 %v547
        %v1180 = vunpack.c.l.b16 %v548
        %v1181 = vunpack.c.h.b16 %v548
        %v1182 = vunpack.c.l.b16 %v549
        %v1183 = vunpack.c.h.b16 %v549
        %v1184 = vunpack.c.l.b16 %v550
        %v1185 = vunpack.c.h.b16 %v550
        %v1186 = vunpack.c.l.b16 %v551
        %v1187 = vunpack.c.h.b16 %v551
        %v1188 = vunpack.c.l.b16 %v552
        %v1189 = vunpack.c.h.b16 %v552
        %v1190 = vunpack.c.l.b16 %v553
        %v1191 = vunpack.c.h.b16 %v553
        %v1192 = vunpack.c.l.b16 %v554
        %v1193 = vunpack.c.h.b16 %v554
        %v1194 = vunpack.c.l.b16 %v555
        %v1195 = vunpack.c.h.b16 %v555
        %v1196 = vunpack.c.l.b16 %v556
        %v1197 = vunpack.c.h.b16 %v556
        %v1198 = vunpack.c.l.b16 %v557
        %v1199 = vunpack.c.h.b16 %v557
        %v1200 = vunpack.c.l.b16 %v558
        %v1201 = vunpack.c.h.b16 %v558
        %v1202 = vunpack.c.l.b16 %v559
        %v1203 = vunpack.c.h.b16 %v559
        %v1204 = vunpack.c.l.b16 %v560
        %v1205 = vunpack.c.h.b16 %v560
        %v1206 = vpack.c.b16 %v818, %v814
        %v1207 = vpack.c.b16 %v819, %v815
        %v1208 = vpack.c.b16 %v820, %v816
        %v1209 = vpack.c.b16 %v821, %v817
        %v1210 = vpack.c.b16 %v826, %v822
        %v1211 = vpack.c.b16 %v827, %v823
        %v1212 = vpack.c.b16 %v828, %v824
        %v1213 = vpack.c.b16 %v829, %v825
        %v1214 = vpack.c.b16 %v834, %v830
        %v1215 = vpack.c.b16 %v835, %v831
        %v1216 = vpack.c.b16 %v836, %v832
        %v1217 = vpack.c.b16 %v837, %v833
        %v1218 = vpack.c.b16 %v842, %v838
        %v1219 = vpack.c.b16 %v843, %v839
        %v1220 = vpack.c.b16 %v844, %v840
        %v1221 = vpack.c.b16 %v845, %v841
        %v1222 = vpack.c.b16 %v850, %v846
        %v1223 = vpack.c.b16 %v851, %v847
        %v1224 = vpack.c.b16 %v852, %v848
        %v1225 = vpack.c.b16 %v853, %v849
        %v1226 = vpack.c.b16 %v858, %v854
        %v1227 = vpack.c.b16 %v859, %v855
        %v1228 = vpack.c.b16 %v860, %v856
        %v1229 = vpack.c.b16 %v861, %v857
        %v1230 = vpack.c.b16 %v866, %v862
        %v1231 = vpack.c.b16 %v867, %v863
        %v1232 = vpack.c.b16 %v868, %v864
        %v1233 = vpack.c.b16 %v869, %v865
        %v1234 = vpack.c.b16 %v874, %v870
        %v1235 = vpack.c.b16 %v875, %v871
        %v1236 = vpack.c.b16 %v876, %v872
        %v1237 = vpack.c.b16 %v877, %v873
        %v1238 = vpack.c.b16 %v882, %v878
        %v1239 = vpack.c.b16 %v883, %v879
        %v1240 = vpack.c.b16 %v884, %v880
        %v1241 = vpack.c.b16 %v885, %v881
        %v1242 = vpack.c.b16 %v890, %v886
        %v1243 = vpack.c.b16 %v891, %v887
        %v1244 = vpack.c.b16 %v892, %v888
        %v1245 = vpack.c.b16 %v893, %v889
        %v1246 = vpack.c.b16 %v898, %v894
        %v1247 = vpack.c.b16 %v899, %v895
        %v1248 = vpack.c.b16 %v900, %v896
        %v1249 = vpack.c.b16 %v901, %v897
        %v1250 = vpack.c.b16 %v906, %v902
        %v1251 = vpack.c.b16 %v907, %v903
        %v1252 = vpack.c.b16 %v908, %v904
        %v1253 = vpack.c.b16 %v909, %v905
        %v1254 = vpack.c.b16 %v914, %v910
        %v1255 = vpack.c.b16 %v915, %v911
        %v1256 = vpack.c.b16 %v916, %v912
        %v1257 = vpack.c.b16 %v917, %v913
        %v1258 = vpack.c.b16 %v922, %v918
        %v1259 = vpack.c.b16 %v923, %v919
        %v1260 = vpack.c.b16 %v924, %v920
        %v1261 = vpack.c.b16 %v925, %v921
        %v1262 = vpack.c.b16 %v930, %v926
        %v1263 = vpack.c.b16 %v931, %v927
        %v1264 = vpack.c.b16 %v932, %v928
        %v1265 = vpack.c.b16 %v933, %v929
        %v1266 = vpack.c.b16 %v938, %v934
        %v1267 = vpack.c.b16 %v939, %v935
        %v1268 = vpack.c.b16 %v940, %v936
        %v1269 = vpack.c.b16 %v941, %v937
        %v1270 = vpack.c.b16 %v946, %v942
        %v1271 = vpack.c.b16 %v947, %v943
        %v1272 = vpack.c.b16 %v948, %v944
        %v1273 = vpack.c.b16 %v949, %v945
        %v1274 = vpack.c.b16 %v954, %v950
        %v1275 = vpack.c.b16 %v955, %v951
        %v1276 = vpack.c.b16 %v956, %v952
        %v1277 = vpack.c.b16 %v957, %v953
        %v1278 = vpack.c.b16 %v962, %v958
        %v1279 = vpack.c.b16 %v963, %v959
        %v1280 = vpack.c.b16 %v964, %v960
        %v1281 = vpack.c.b16 %v965, %v961
        %v1282 = vpack.c.b16 %v970, %v966
        %v1283 = vpack.c.b16 %v971, %v967
        %v1284 = vpack.c.b16 %v972, %v968
        %v1285 = vpack.c.b16 %v973, %v969
        %v1286 = vpack.c.b16 %v978, %v974
        %v1287 = vpack.c.b16 %v979, %v975
        %v1288 = vpack.c.b16 %v980, %v976
        %v1289 = vpack.c.b16 %v981, %v977
        %v1290 = vpack.c.b16 %v986, %v982
        %v1291 = vpack.c.b16 %v987, %v983
        %v1292 = vpack.c.b16 %v988, %v984
        %v1293 = vpack.c.b16 %v989, %v985
        %v1294 = vpack.c.b16 %v994, %v990
        %v1295 = vpack.c.b16 %v995, %v991
        %v1296 = vpack.c.b16 %v996, %v992
        %v1297 = vpack.c.b16 %v997, %v993
        %v1298 = vpack.c.b16 %v1002, %v998
        %v1299 = vpack.c.b16 %v1003, %v999
        %v1300 = vpack.c.b16 %v1004, %v1000
        %v1301 = vpack.c.b16 %v1005, %v1001
        %v1302 = vpack.c.b16 %v1010, %v1006
        %v1303 = vpack.c.b16 %v1011, %v1007
        %v1304 = vpack.c.b16 %v1012, %v1008
        %v1305 = vpack.c.b16 %v1013, %v1009
        %v1306 = vpack.c.b16 %v1018, %v1014
        %v1307 = vpack.c.b16 %v1019, %v1015
        %v1308 = vpack.c.b16 %v1020, %v1016
        %v1309 = vpack.c.b16 %v1021, %v1017
        %v1310 = vpack.c.b16 %v1026, %v1022
        %v1311 = vpack.c.b16 %v1027, %v1023
        %v1312 = vpack.c.b16 %v1028, %v1024
        %v1313 = vpack.c.b16 %v1029, %v1025
        %v1314 = vpack.c.b16 %v1034, %v1030
        %v1315 = vpack.c.b16 %v1035, %v1031
        %v1316 = vpack.c.b16 %v1036, %v1032
        %v1317 = vpack.c.b16 %v1037, %v1033
        %v1318 = vpack.c.b16 %v1042, %v1038
        %v1319 = vpack.c.b16 %v1043, %v1039
        %v1320 = vpack.c.b16 %v1044, %v1040
        %v1321 = vpack.c.b16 %v1045, %v1041
        %v1322 = vpack.c.b16 %v1050, %v1046
        %v1323 = vpack.c.b16 %v1051, %v1047
        %v1324 = vpack.c.b16 %v1052, %v1048
        %v1325 = vpack.c.b16 %v1053, %v1049
        %v1326 = vpack.c.b16 %v1058, %v1054
        %v1327 = vpack.c.b16 %v1059, %v1055
        %v1328 = vpack.c.b16 %v1060, %v1056
        %v1329 = vpack.c.b16 %v1061, %v1057
        %v1330 = vpack.c.b16 %v1066, %v1062
        %v1331 = vpack.c.b16 %v1067, %v1063
        %v1332 = vpack.c.b16 %v1068, %v1064
        %v1333 = vpack.c.b16 %v1069, %v1065
        %v1334 = vpack.c.b16 %v1074, %v1070
        %v1335 = vpack.c.b16 %v1075, %v1071
        %v1336 = vpack.c.b16 %v1076, %v1072
        %v1337 = vpack.c.b16 %v1077, %v1073
        %v1338 = vpack.c.b16 %v1082, %v1078
        %v1339 = vpack.c.b16 %v1083, %v1079
        %v1340 = vpack.c.b16 %v1084, %v1080
        %v1341 = vpack.c.b16 %v1085, %v1081
        %v1342 = vpack.c.b16 %v1090, %v1086
        %v1343 = vpack.c.b16 %v1091, %v1087
        %v1344 = vpack.c.b16 %v1092, %v1088
        %v1345 = vpack.c.b16 %v1093, %v1089
        %v1346 = vpack.c.b16 %v1098, %v1094
        %v1347 = vpack.c.b16 %v1099, %v1095
        %v1348 = vpack.c.b16 %v1100, %v1096
        %v1349 = vpack.c.b16 %v1101, %v1097
        %v1350 = vpack.c.b16 %v1106, %v1102
        %v1351 = vpack.c.b16 %v1107, %v1103
        %v1352 = vpack.c.b16 %v1108, %v1104
        %v1353 = vpack.c.b16 %v1109, %v1105
        %v1354 = vpack.c.b16 %v1114, %v1110
        %v1355 = vpack.c.b16 %v1115, %v1111
        %v1356 = vpack.c.b16 %v1116, %v1112
        %v1357 = vpack.c.b16 %v1117, %v1113
        %v1358 = vpack.c.b16 %v1122, %v1118
        %v1359 = vpack.c.b16 %v1123, %v1119
        %v1360 = vpack.c.b16 %v1124, %v1120
        %v1361 = vpack.c.b16 %v1125, %v1121
        %v1362 = vpack.c.b16 %v1130, %v1126
        %v1363 = vpack.c.b16 %v1131, %v1127
        %v1364 = vpack.c.b16 %v1132, %v1128
        %v1365 = vpack.c.b16 %v1133, %v1129
        %v1366 = vpack.c.b16 %v1138, %v1134
        %v1367 = vpack.c.b16 %v1139, %v1135
        %v1368 = vpack.c.b16 %v1140, %v1136
        %v1369 = vpack.c.b16 %v1141, %v1137
        %v1370 = vpack.c.b16 %v1146, %v1142
        %v1371 = vpack.c.b16 %v1147, %v1143
        %v1372 = vpack.c.b16 %v1148, %v1144
        %v1373 = vpack.c.b16 %v1149, %v1145
        %v1374 = vpack.c.b16 %v1154, %v1150
        %v1375 = vpack.c.b16 %v1155, %v1151
        %v1376 = vpack.c.b16 %v1156, %v1152
        %v1377 = vpack.c.b16 %v1157, %v1153
        %v1378 = vpack.c.b16 %v1162, %v1158
        %v1379 = vpack.c.b16 %v1163, %v1159
        %v1380 = vpack.c.b16 %v1164, %v1160
        %v1381 = vpack.c.b16 %v1165, %v1161
        %v1382 = vpack.c.b16 %v1170, %v1166
        %v1383 = vpack.c.b16 %v1171, %v1167
        %v1384 = vpack.c.b16 %v1172, %v1168
        %v1385 = vpack.c.b16 %v1173, %v1169
        %v1386 = vpack.c.b16 %v1178, %v1174
        %v1387 = vpack.c.b16 %v1179, %v1175
        %v1388 = vpack.c.b16 %v1180, %v1176
        %v1389 = vpack.c.b16 %v1181, %v1177
        %v1390 = vpack.c.b16 %v1186, %v1182
        %v1391 = vpack.c.b16 %v1187, %v1183
        %v1392 = vpack.c.b16 %v1188, %v1184
        %v1393 = vpack.c.b16 %v1189, %v1185
        %v1394 = vpack.c.b16 %v1194, %v1190
        %v1395 = vpack.c.b16 %v1195, %v1191
        %v1396 = vpack.c.b16 %v1196, %v1192
        %v1397 = vpack.c.b16 %v1197, %v1193
        %v1398 = vpack.c.b16 %v1202, %v1198
        %v1399 = vpack.c.b16 %v1203, %v1199
        %v1400 = vpack.c.b16 %v1204, %v1200
        %v1401 = vpack.c.b16 %v1205, %v1201
        %vm1598 = vcmask 130048
        %v1600 = vsel %vm1598, %v611, 0
        %1602 = vmatprep.subr.bf16.mxu0 %v1235
        %1603 = vmatpush1.bf16.msra.mxu0 %v1234
        %1604 = vmatprep.subr.bf16.mxu0 %v1231
        %1605 = vmatpush1.bf16.msra.mxu0 %v1230
        %1606 = vmatprep.subr.bf16.mxu0 %v1227
        %1607 = vmatpush1.bf16.msra.mxu0 %v1226
        %1608 = vmatprep.subr.bf16.mxu0 %v1223
        %1609 = vmatpush1.bf16.msra.mxu0 %v1222
        %1610 = vmatprep.subr.bf16.mxu0 %v1219
        %1611 = vmatpush1.bf16.msra.mxu0 %v1218
        %1612 = vmatprep.subr.bf16.mxu0 %v1215
        %1613 = vmatpush1.bf16.msra.mxu0 %v1214
        %1614 = vmatprep.subr.bf16.mxu0 %v1211
        %1615 = vmatpush1.bf16.msra.mxu0 %v1210
        %1616 = vmatprep.subr.bf16.mxu0 %v1207
        %1617 = vmatpush1.bf16.msra.mxu0 %v1206
        %1618 = vmatprep.subr.bf16.mxu0 %v1267
        %1619 = vmatpush2.bf16.msra.mxu0 %v1266
        %1620 = vmatprep.subr.bf16.mxu0 %v1263
        %1621 = vmatpush2.bf16.msra.mxu0 %v1262
        %1622 = vmatprep.subr.bf16.mxu0 %v1259
        %1623 = vmatpush2.bf16.msra.mxu0 %v1258
        %1624 = vmatprep.subr.bf16.mxu0 %v1255
        %1625 = vmatpush2.bf16.msra.mxu0 %v1254
        %1626 = vmatprep.subr.bf16.mxu0 %v1251
        %1627 = vmatpush2.bf16.msra.mxu0 %v1250
        %1628 = vmatprep.subr.bf16.mxu0 %v1247
        %1629 = vmatpush2.bf16.msra.mxu0 %v1246
        %1630 = vmatprep.subr.bf16.mxu0 %v1243
        %1631 = vmatpush2.bf16.msra.mxu0 %v1242
        %1632 = vmatprep.subr.bf16.mxu0 %v1239
        %1633 = vmatpush2.bf16.msra.mxu0 %v1238
        %1634 = vmatprep.mubr.bf16.mxu0 %v606
        %1635 = vmatmul.mubr.bf16.gmra.mxu0 %v605
        %v1636 = vpop.f32.mrf.mxu0
        %v1637 = vadd.f32 %v566, %v1636
        %v1638 = vpop.f32.mrf.mxu0
        %v1639 = vadd.f32 %v570, %v1638
        %v1640 = vpop.f32.mrf.mxu0
        %v1641 = vadd.f32 %v566, %v1640
        %v1642 = vpop.f32.mrf.mxu0
        %v1643 = vadd.f32 %v570, %v1642
        %1644 = vdwg.mxu0
        %1645 = vmatprep.subr.bf16.mxu0 %v1299
        %1646 = vmatpush1.bf16.msra.mxu0 %v1298
        %1647 = vmatprep.subr.bf16.mxu0 %v1295
        %1648 = vmatpush1.bf16.msra.mxu0 %v1294
        %1649 = vmatprep.subr.bf16.mxu0 %v1291
        %1650 = vmatpush1.bf16.msra.mxu0 %v1290
        %1651 = vmatprep.subr.bf16.mxu0 %v1287
        %1652 = vmatpush1.bf16.msra.mxu0 %v1286
        %1653 = vmatprep.subr.bf16.mxu0 %v1283
        %1654 = vmatpush1.bf16.msra.mxu0 %v1282
        %1655 = vmatprep.subr.bf16.mxu0 %v1279
        %1656 = vmatpush1.bf16.msra.mxu0 %v1278
        %1657 = vmatprep.subr.bf16.mxu0 %v1275
        %1658 = vmatpush1.bf16.msra.mxu0 %v1274
        %1659 = vmatprep.subr.bf16.mxu0 %v1271
        %1660 = vmatpush1.bf16.msra.mxu0 %v1270
        %1661 = vmatprep.subr.bf16.mxu0 %v1331
        %1662 = vmatpush2.bf16.msra.mxu0 %v1330
        %1663 = vmatprep.subr.bf16.mxu0 %v1327
        %1664 = vmatpush2.bf16.msra.mxu0 %v1326
        %1665 = vmatprep.subr.bf16.mxu0 %v1323
        %1666 = vmatpush2.bf16.msra.mxu0 %v1322
        %1667 = vmatprep.subr.bf16.mxu0 %v1319
        %1668 = vmatpush2.bf16.msra.mxu0 %v1318
        %1669 = vmatprep.subr.bf16.mxu0 %v1315
        %1670 = vmatpush2.bf16.msra.mxu0 %v1314
        %1671 = vmatprep.subr.bf16.mxu0 %v1311
        %1672 = vmatpush2.bf16.msra.mxu0 %v1310
        %1673 = vmatprep.subr.bf16.mxu0 %v1307
        %1674 = vmatpush2.bf16.msra.mxu0 %v1306
        %1675 = vmatprep.subr.bf16.mxu0 %v1303
        %1676 = vmatpush2.bf16.msra.mxu0 %v1302
        %1677 = vmatprep.mubr.bf16.mxu0 %v608
        %1678 = vmatmul.mubr.bf16.gmra.mxu0 %v607
        %v1679 = vpop.f32.mrf.mxu0
        %v1680 = vadd.f32 %v1637, %v1679
        %v1681 = vpop.f32.mrf.mxu0
        %v1682 = vadd.f32 %v1639, %v1681
        %v1683 = vpop.f32.mrf.mxu0
        %v1684 = vadd.f32 %v1641, %v1683
        %v1685 = vpop.f32.mrf.mxu0
        %v1686 = vadd.f32 %v1643, %v1685
        %1687 = vdwg.mxu0
        %1688 = vmatprep.subr.bf16.mxu0 %v1363
        %1689 = vmatpush1.bf16.msra.mxu0 %v1362
        %1690 = vmatprep.subr.bf16.mxu0 %v1359
        %1691 = vmatpush1.bf16.msra.mxu0 %v1358
        %1692 = vmatprep.subr.bf16.mxu0 %v1355
        %1693 = vmatpush1.bf16.msra.mxu0 %v1354
        %1694 = vmatprep.subr.bf16.mxu0 %v1351
        %1695 = vmatpush1.bf16.msra.mxu0 %v1350
        %1696 = vmatprep.subr.bf16.mxu0 %v1347
        %1697 = vmatpush1.bf16.msra.mxu0 %v1346
        %1698 = vmatprep.subr.bf16.mxu0 %v1343
        %1699 = vmatpush1.bf16.msra.mxu0 %v1342
        %1700 = vmatprep.subr.bf16.mxu0 %v1339
        %1701 = vmatpush1.bf16.msra.mxu0 %v1338
        %1702 = vmatprep.subr.bf16.mxu0 %v1335
        %1703 = vmatpush1.bf16.msra.mxu0 %v1334
        %1704 = vmatprep.subr.bf16.mxu0 %v1395
        %1705 = vmatpush2.bf16.msra.mxu0 %v1394
        %1706 = vmatprep.subr.bf16.mxu0 %v1391
        %1707 = vmatpush2.bf16.msra.mxu0 %v1390
        %1708 = vmatprep.subr.bf16.mxu0 %v1387
        %1709 = vmatpush2.bf16.msra.mxu0 %v1386
        %1710 = vmatprep.subr.bf16.mxu0 %v1383
        %1711 = vmatpush2.bf16.msra.mxu0 %v1382
        %1712 = vmatprep.subr.bf16.mxu0 %v1379
        %1713 = vmatpush2.bf16.msra.mxu0 %v1378
        %1714 = vmatprep.subr.bf16.mxu0 %v1375
        %1715 = vmatpush2.bf16.msra.mxu0 %v1374
        %1716 = vmatprep.subr.bf16.mxu0 %v1371
        %1717 = vmatpush2.bf16.msra.mxu0 %v1370
        %1718 = vmatprep.subr.bf16.mxu0 %v1367
        %1719 = vmatpush2.bf16.msra.mxu0 %v1366
        %1720 = vmatprep.mubr.bf16.mxu0 %v610
        %1721 = vmatmul.mubr.bf16.gmra.mxu0 %v609
        %v1722 = vpop.f32.mrf.mxu0
        %v1723 = vadd.f32 %v1680, %v1722
        %v1724 = vpop.f32.mrf.mxu0
        %v1725 = vadd.f32 %v1682, %v1724
        %v1726 = vpop.f32.mrf.mxu0
        %v1727 = vadd.f32 %v1684, %v1726
        %v1728 = vpop.f32.mrf.mxu0
        %v1729 = vadd.f32 %v1686, %v1728
        %1730 = vdwg.mxu0
        %1731 = vmatprep.subr.bf16.mxu0 0
        %1732 = vmatpush1.bf16.msra.mxu0 0
        %1733 = vmatprep.subr.bf16.mxu0 0
        %1734 = vmatpush1.bf16.msra.mxu0 0
        %1735 = vmatprep.subr.bf16.mxu0 0
        %1736 = vmatpush1.bf16.msra.mxu0 0
        %1737 = vmatprep.subr.bf16.mxu0 0
        %1738 = vmatpush1.bf16.msra.mxu0 0
        %1739 = vmatprep.subr.bf16.mxu0 0
        %1740 = vmatpush1.bf16.msra.mxu0 0
        %1741 = vmatprep.subr.bf16.mxu0 0
        %1742 = vmatpush1.bf16.msra.mxu0 0
        %1743 = vmatprep.subr.bf16.mxu0 0
        %1744 = vmatpush1.bf16.msra.mxu0 0
        %1745 = vmatprep.subr.bf16.mxu0 %v1399
        %1746 = vmatpush1.bf16.msra.mxu0 %v1398
        %1747 = vmatprep.subr.bf16.mxu0 0
        %1748 = vmatpush2.bf16.msra.mxu0 0
        %1749 = vmatprep.subr.bf16.mxu0 0
        %1750 = vmatpush2.bf16.msra.mxu0 0
        %1751 = vmatprep.subr.bf16.mxu0 0
        %1752 = vmatpush2.bf16.msra.mxu0 0
        %1753 = vmatprep.subr.bf16.mxu0 0
        %1754 = vmatpush2.bf16.msra.mxu0 0
        %1755 = vmatprep.subr.bf16.mxu0 0
        %1756 = vmatpush2.bf16.msra.mxu0 0
        %1757 = vmatprep.subr.bf16.mxu0 0
        %1758 = vmatpush2.bf16.msra.mxu0 0
        %1759 = vmatprep.subr.bf16.mxu0 0
        %1760 = vmatpush2.bf16.msra.mxu0 0
        %1761 = vmatprep.subr.bf16.mxu0 0
        %1762 = vmatpush2.bf16.msra.mxu0 0
        %1763 = vmatprep.mubr.bf16.mxu0 0
        %1764 = vmatmul.mubr.bf16.gmra.mxu0 %v1600
        %v1765 = vpop.f32.mrf.mxu0
        %v1766 = vadd.f32 %v1723, %v1765
        %v1767 = vpop.f32.mrf.mxu0
        %v1768 = vadd.f32 %v1725, %v1767
        %v1769 = vpop.f32.mrf.mxu0
        %v1770 = vadd.f32 %v1727, %v1769
        %v1771 = vpop.f32.mrf.mxu0
        %v1772 = vadd.f32 %v1729, %v1771
        %1773 = vdwg.mxu0
        %1774 = vmatprep.subr.bf16.mxu0 %v1237
        %1775 = vmatpush1.bf16.msra.mxu0 %v1236
        %1776 = vmatprep.subr.bf16.mxu0 %v1233
        %1777 = vmatpush1.bf16.msra.mxu0 %v1232
        %1778 = vmatprep.subr.bf16.mxu0 %v1229
        %1779 = vmatpush1.bf16.msra.mxu0 %v1228
        %1780 = vmatprep.subr.bf16.mxu0 %v1225
        %1781 = vmatpush1.bf16.msra.mxu0 %v1224
        %1782 = vmatprep.subr.bf16.mxu0 %v1221
        %1783 = vmatpush1.bf16.msra.mxu0 %v1220
        %1784 = vmatprep.subr.bf16.mxu0 %v1217
        %1785 = vmatpush1.bf16.msra.mxu0 %v1216
        %1786 = vmatprep.subr.bf16.mxu0 %v1213
        %1787 = vmatpush1.bf16.msra.mxu0 %v1212
        %1788 = vmatprep.subr.bf16.mxu0 %v1209
        %1789 = vmatpush1.bf16.msra.mxu0 %v1208
        %1790 = vmatprep.subr.bf16.mxu0 %v1269
        %1791 = vmatpush2.bf16.msra.mxu0 %v1268
        %1792 = vmatprep.subr.bf16.mxu0 %v1265
        %1793 = vmatpush2.bf16.msra.mxu0 %v1264
        %1794 = vmatprep.subr.bf16.mxu0 %v1261
        %1795 = vmatpush2.bf16.msra.mxu0 %v1260
        %1796 = vmatprep.subr.bf16.mxu0 %v1257
        %1797 = vmatpush2.bf16.msra.mxu0 %v1256
        %1798 = vmatprep.subr.bf16.mxu0 %v1253
        %1799 = vmatpush2.bf16.msra.mxu0 %v1252
        %1800 = vmatprep.subr.bf16.mxu0 %v1249
        %1801 = vmatpush2.bf16.msra.mxu0 %v1248
        %1802 = vmatprep.subr.bf16.mxu0 %v1245
        %1803 = vmatpush2.bf16.msra.mxu0 %v1244
        %1804 = vmatprep.subr.bf16.mxu0 %v1241
        %1805 = vmatpush2.bf16.msra.mxu0 %v1240
        %1806 = vmatprep.mubr.bf16.mxu0 %v606
        %1807 = vmatmul.mubr.bf16.gmra.mxu0 %v605
        %v1808 = vpop.f32.mrf.mxu0
        %v1809 = vadd.f32 %v574, %v1808
        %v1810 = vpop.f32.mrf.mxu0
        %v1811 = vadd.f32 %v578, %v1810
        %v1812 = vpop.f32.mrf.mxu0
        %v1813 = vadd.f32 %v574, %v1812
        %v1814 = vpop.f32.mrf.mxu0
        %v1815 = vadd.f32 %v578, %v1814
        %1816 = vdwg.mxu0
        %1817 = vmatprep.subr.bf16.mxu0 %v1301
        %1818 = vmatpush1.bf16.msra.mxu0 %v1300
        %1819 = vmatprep.subr.bf16.mxu0 %v1297
        %1820 = vmatpush1.bf16.msra.mxu0 %v1296
        %1821 = vmatprep.subr.bf16.mxu0 %v1293
        %1822 = vmatpush1.bf16.msra.mxu0 %v1292
        %1823 = vmatprep.subr.bf16.mxu0 %v1289
        %1824 = vmatpush1.bf16.msra.mxu0 %v1288
        %1825 = vmatprep.subr.bf16.mxu0 %v1285
        %1826 = vmatpush1.bf16.msra.mxu0 %v1284
        %1827 = vmatprep.subr.bf16.mxu0 %v1281
        %1828 = vmatpush1.bf16.msra.mxu0 %v1280
        %1829 = vmatprep.subr.bf16.mxu0 %v1277
        %1830 = vmatpush1.bf16.msra.mxu0 %v1276
        %1831 = vmatprep.subr.bf16.mxu0 %v1273
        %1832 = vmatpush1.bf16.msra.mxu0 %v1272
        %1833 = vmatprep.subr.bf16.mxu0 %v1333
        %1834 = vmatpush2.bf16.msra.mxu0 %v1332
        %1835 = vmatprep.subr.bf16.mxu0 %v1329
        %1836 = vmatpush2.bf16.msra.mxu0 %v1328
        %1837 = vmatprep.subr.bf16.mxu0 %v1325
        %1838 = vmatpush2.bf16.msra.mxu0 %v1324
        %1839 = vmatprep.subr.bf16.mxu0 %v1321
        %1840 = vmatpush2.bf16.msra.mxu0 %v1320
        %1841 = vmatprep.subr.bf16.mxu0 %v1317
        %1842 = vmatpush2.bf16.msra.mxu0 %v1316
        %1843 = vmatprep.subr.bf16.mxu0 %v1313
        %1844 = vmatpush2.bf16.msra.mxu0 %v1312
        %1845 = vmatprep.subr.bf16.mxu0 %v1309
        %1846 = vmatpush2.bf16.msra.mxu0 %v1308
        %1847 = vmatprep.subr.bf16.mxu0 %v1305
        %1848 = vmatpush2.bf16.msra.mxu0 %v1304
        %1849 = vmatprep.mubr.bf16.mxu0 %v608
        %1850 = vmatmul.mubr.bf16.gmra.mxu0 %v607
        %v1851 = vpop.f32.mrf.mxu0
        %v1852 = vadd.f32 %v1809, %v1851
        %v1853 = vpop.f32.mrf.mxu0
        %v1854 = vadd.f32 %v1811, %v1853
        %v1855 = vpop.f32.mrf.mxu0
        %v1856 = vadd.f32 %v1813, %v1855
        %v1857 = vpop.f32.mrf.mxu0
        %v1858 = vadd.f32 %v1815, %v1857
        %1859 = vdwg.mxu0
        %1860 = vmatprep.subr.bf16.mxu0 %v1365
        %1861 = vmatpush1.bf16.msra.mxu0 %v1364
        %1862 = vmatprep.subr.bf16.mxu0 %v1361
        %1863 = vmatpush1.bf16.msra.mxu0 %v1360
        %1864 = vmatprep.subr.bf16.mxu0 %v1357
        %1865 = vmatpush1.bf16.msra.mxu0 %v1356
        %1866 = vmatprep.subr.bf16.mxu0 %v1353
        %1867 = vmatpush1.bf16.msra.mxu0 %v1352
        %1868 = vmatprep.subr.bf16.mxu0 %v1349
        %1869 = vmatpush1.bf16.msra.mxu0 %v1348
        %1870 = vmatprep.subr.bf16.mxu0 %v1345
        %1871 = vmatpush1.bf16.msra.mxu0 %v1344
        %1872 = vmatprep.subr.bf16.mxu0 %v1341
        %1873 = vmatpush1.bf16.msra.mxu0 %v1340
        %1874 = vmatprep.subr.bf16.mxu0 %v1337
        %1875 = vmatpush1.bf16.msra.mxu0 %v1336
        %1876 = vmatprep.subr.bf16.mxu0 %v1397
        %1877 = vmatpush2.bf16.msra.mxu0 %v1396
        %1878 = vmatprep.subr.bf16.mxu0 %v1393
        %1879 = vmatpush2.bf16.msra.mxu0 %v1392
        %1880 = vmatprep.subr.bf16.mxu0 %v1389
        %1881 = vmatpush2.bf16.msra.mxu0 %v1388
        %1882 = vmatprep.subr.bf16.mxu0 %v1385
        %1883 = vmatpush2.bf16.msra.mxu0 %v1384
        %1884 = vmatprep.subr.bf16.mxu0 %v1381
        %1885 = vmatpush2.bf16.msra.mxu0 %v1380
        %1886 = vmatprep.subr.bf16.mxu0 %v1377
        %1887 = vmatpush2.bf16.msra.mxu0 %v1376
        %1888 = vmatprep.subr.bf16.mxu0 %v1373
        %1889 = vmatpush2.bf16.msra.mxu0 %v1372
        %1890 = vmatprep.subr.bf16.mxu0 %v1369
        %1891 = vmatpush2.bf16.msra.mxu0 %v1368
        %1892 = vmatprep.mubr.bf16.mxu0 %v610
        %1893 = vmatmul.mubr.bf16.gmra.mxu0 %v609
        %v1894 = vpop.f32.mrf.mxu0
        %v1895 = vadd.f32 %v1852, %v1894
        %v1896 = vpop.f32.mrf.mxu0
        %v1897 = vadd.f32 %v1854, %v1896
        %v1898 = vpop.f32.mrf.mxu0
        %v1899 = vadd.f32 %v1856, %v1898
        %v1900 = vpop.f32.mrf.mxu0
        %v1901 = vadd.f32 %v1858, %v1900
        %1902 = vdwg.mxu0
        %1903 = vmatprep.subr.bf16.mxu0 0
        %1904 = vmatpush1.bf16.msra.mxu0 0
        %1905 = vmatprep.subr.bf16.mxu0 0
        %1906 = vmatpush1.bf16.msra.mxu0 0
        %1907 = vmatprep.subr.bf16.mxu0 0
        %1908 = vmatpush1.bf16.msra.mxu0 0
        %1909 = vmatprep.subr.bf16.mxu0 0
        %1910 = vmatpush1.bf16.msra.mxu0 0
        %1911 = vmatprep.subr.bf16.mxu0 0
        %1912 = vmatpush1.bf16.msra.mxu0 0
        %1913 = vmatprep.subr.bf16.mxu0 0
        %1914 = vmatpush1.bf16.msra.mxu0 0
        %1915 = vmatprep.subr.bf16.mxu0 0
        %1916 = vmatpush1.bf16.msra.mxu0 0
        %1917 = vmatprep.subr.bf16.mxu0 %v1401
        %1918 = vmatpush1.bf16.msra.mxu0 %v1400
        %1919 = vmatprep.subr.bf16.mxu0 0
        %1920 = vmatpush2.bf16.msra.mxu0 0
        %1921 = vmatprep.subr.bf16.mxu0 0
        %1922 = vmatpush2.bf16.msra.mxu0 0
        %1923 = vmatprep.subr.bf16.mxu0 0
        %1924 = vmatpush2.bf16.msra.mxu0 0
        %1925 = vmatprep.subr.bf16.mxu0 0
        %1926 = vmatpush2.bf16.msra.mxu0 0
        %1927 = vmatprep.subr.bf16.mxu0 0
        %1928 = vmatpush2.bf16.msra.mxu0 0
        %1929 = vmatprep.subr.bf16.mxu0 0
        %1930 = vmatpush2.bf16.msra.mxu0 0
        %1931 = vmatprep.subr.bf16.mxu0 0
        %1932 = vmatpush2.bf16.msra.mxu0 0
        %1933 = vmatprep.subr.bf16.mxu0 0
        %1934 = vmatpush2.bf16.msra.mxu0 0
        %1935 = vmatprep.mubr.bf16.mxu0 0
        %1936 = vmatmul.mubr.bf16.gmra.mxu0 %v1600
        %v1937 = vpop.f32.mrf.mxu0
        %v1938 = vadd.f32 %v1895, %v1937
        %v1939 = vpop.f32.mrf.mxu0
        %v1940 = vadd.f32 %v1897, %v1939
        %v1941 = vpop.f32.mrf.mxu0
        %v1942 = vadd.f32 %v1899, %v1941
        %v1943 = vpop.f32.mrf.mxu0
        %v1944 = vadd.f32 %v1901, %v1943
        %1945 = vdwg.mxu0
        %v1946 = vmax.f32 %v1766, 0.0
        %v1947 = vmax.f32 %v1768, 0.0
        %v1948 = vmax.f32 %v1938, 0.0
        %v1949 = vmax.f32 %v1940, 0.0
        %v1950 = vmax.f32 %v1770, 0.0
        %v1951 = vmax.f32 %v1772, 0.0
        %v1952 = vmax.f32 %v1942, 0.0
        %v1953 = vmax.f32 %v1944, 0.0
        %v1954 = vpack.c.bf16 %v1950, %v1946
        %v1955 = vpack.c.bf16 %v1951, %v1947
        %v1956 = vpack.c.bf16 %v1952, %v1948
        %v1957 = vpack.c.bf16 %v1953, %v1949
        %v1958 = vld [vmem:[#allocation8] sm:$0xff]
        %v1959 = vld [vmem:[#allocation8 + $0x8] sm:$0xff]
        %v1960 = vld [vmem:[#allocation8 + $0x10] sm:$0xff]
        %v1961 = vld [vmem:[#allocation8 + $0x18] sm:$0xff]
        %v1962 = vld [vmem:[#allocation8 + $0x20] sm:$0xff]
        %v1963 = vld [vmem:[#allocation8 + $0x28] sm:$0xff]
        %v1964 = vld [vmem:[#allocation8 + $0x30] sm:$0xff]
        %v1965 = vld [vmem:[#allocation8 + $0x38] sm:$0xff]
        %v1966 = vld [vmem:[#allocation8 + $0x40] sm:$0xff]
        %v1967 = vld [vmem:[#allocation8 + $0x48] sm:$0xff]
        %v1968 = vld [vmem:[#allocation8 + $0x50] sm:$0xff]
        %v1969 = vld [vmem:[#allocation8 + $0x58] sm:$0xff]
        %v1970 = vld [vmem:[#allocation8 + $0x60] sm:$0xff]
        %v1971 = vld [vmem:[#allocation8 + $0x68] sm:$0xff]
        %v1972 = vld [vmem:[#allocation8 + $0x70] sm:$0xff]
        %v1973 = vld [vmem:[#allocation8 + $0x78] sm:$0xff]
        %v1974 = vld [vmem:[#allocation8 + $0x80] sm:$0xff]
        %v1975 = vld [vmem:[#allocation8 + $0x88] sm:$0xff]
        %v1976 = vld [vmem:[#allocation8 + $0x90] sm:$0xff]
        %v1977 = vld [vmem:[#allocation8 + $0x98] sm:$0xff]
        %v1978 = vld [vmem:[#allocation8 + $0xa0] sm:$0xff]
        %v1979 = vld [vmem:[#allocation8 + $0xa8] sm:$0xff]
        %v1980 = vld [vmem:[#allocation8 + $0xb0] sm:$0xff]
        %v1981 = vld [vmem:[#allocation8 + $0xb8] sm:$0xff]
        %v1982 = vld [vmem:[#allocation8 + $0xc0] sm:$0xff]
        %v1983 = vld [vmem:[#allocation8 + $0xc8] sm:$0xff]
        %v1984 = vld [vmem:[#allocation8 + $0xd0] sm:$0xff]
        %v1985 = vld [vmem:[#allocation8 + $0xd8] sm:$0xff]
        %v1986 = vld [vmem:[#allocation8 + $0xe0] sm:$0xff]
        %v1987 = vld [vmem:[#allocation8 + $0xe8] sm:$0xff]
        %v1988 = vld [vmem:[#allocation8 + $0xf0] sm:$0xff]
        %v1989 = vld [vmem:[#allocation8 + $0xf8] sm:$0xff]
        %v1990 = vld [vmem:[#allocation8 + $0x100] sm:$0xff]
        %v1991 = vld [vmem:[#allocation8 + $0x108] sm:$0xff]
        %v1992 = vld [vmem:[#allocation8 + $0x110] sm:$0xff]
        %v1993 = vld [vmem:[#allocation8 + $0x118] sm:$0xff]
        %v1994 = vld [vmem:[#allocation8 + $0x120] sm:$0xff]
        %v1995 = vld [vmem:[#allocation8 + $0x128] sm:$0xff]
        %v1996 = vld [vmem:[#allocation8 + $0x130] sm:$0xff]
        %v1997 = vld [vmem:[#allocation8 + $0x138] sm:$0xff]
        %v1998 = vld [vmem:[#allocation8 + $0x140] sm:$0xff]
        %v1999 = vld [vmem:[#allocation8 + $0x148] sm:$0xff]
        %v2000 = vld [vmem:[#allocation8 + $0x150] sm:$0xff]
        %v2001 = vld [vmem:[#allocation8 + $0x158] sm:$0xff]
        %v2002 = vld [vmem:[#allocation8 + $0x160] sm:$0xff]
        %v2003 = vld [vmem:[#allocation8 + $0x168] sm:$0xff]
        %v2004 = vld [vmem:[#allocation8 + $0x170] sm:$0xff]
        %v2005 = vld [vmem:[#allocation8 + $0x178] sm:$0xff]
        %v2006 = vld [vmem:[#allocation8 + $0x180] sm:$0xff]
        %v2007 = vld [vmem:[#allocation8 + $0x188] sm:$0xff]
        %v2008 = vld [vmem:[#allocation8 + $0x190] sm:$0xff]
        %v2009 = vld [vmem:[#allocation8 + $0x198] sm:$0xff]
        %v2010 = vld [vmem:[#allocation8 + $0x1a0] sm:$0xff]
        %v2011 = vld [vmem:[#allocation8 + $0x1a8] sm:$0xff]
        %v2012 = vld [vmem:[#allocation8 + $0x1b0] sm:$0xff]
        %v2013 = vld [vmem:[#allocation8 + $0x1b8] sm:$0xff]
        %v2014 = vld [vmem:[#allocation8 + $0x1c0] sm:$0xff]
        %v2015 = vld [vmem:[#allocation8 + $0x1c8] sm:$0xff]
        %v2016 = vld [vmem:[#allocation8 + $0x1d0] sm:$0xff]
        %v2017 = vld [vmem:[#allocation8 + $0x1d8] sm:$0xff]
        %v2018 = vld [vmem:[#allocation8 + $0x1e0] sm:$0xff]
        %v2019 = vld [vmem:[#allocation8 + $0x1e8] sm:$0xff]
        %v2020 = vld [vmem:[#allocation8 + $0x1f0] sm:$0xff]
        %v2021 = vld [vmem:[#allocation8 + $0x1f8] sm:$0xff]
        %v2022 = vld [vmem:[#allocation8 + $0x200] sm:$0xff]
        %v2023 = vld [vmem:[#allocation8 + $0x208] sm:$0xff]
        %v2024 = vld [vmem:[#allocation8 + $0x210] sm:$0xff]
        %v2025 = vld [vmem:[#allocation8 + $0x218] sm:$0xff]
        %v2026 = vld [vmem:[#allocation8 + $0x220] sm:$0xff]
        %v2027 = vld [vmem:[#allocation8 + $0x228] sm:$0xff]
        %v2028 = vld [vmem:[#allocation8 + $0x230] sm:$0xff]
        %v2029 = vld [vmem:[#allocation8 + $0x238] sm:$0xff]
        %v2030 = vld [vmem:[#allocation8 + $0x240] sm:$0xff]
        %v2031 = vld [vmem:[#allocation8 + $0x248] sm:$0xff]
        %v2032 = vld [vmem:[#allocation8 + $0x250] sm:$0xff]
        %v2033 = vld [vmem:[#allocation8 + $0x258] sm:$0xff]
        %v2034 = vld [vmem:[#allocation8 + $0x260] sm:$0xff]
        %v2035 = vld [vmem:[#allocation8 + $0x268] sm:$0xff]
        %v2036 = vld [vmem:[#allocation8 + $0x270] sm:$0xff]
        %v2037 = vld [vmem:[#allocation8 + $0x278] sm:$0xff]
        %v2038 = vld [vmem:[#allocation8 + $0x280] sm:$0xff]
        %v2039 = vld [vmem:[#allocation8 + $0x288] sm:$0xff]
        %v2040 = vld [vmem:[#allocation8 + $0x290] sm:$0xff]
        %v2041 = vld [vmem:[#allocation8 + $0x298] sm:$0xff]
        %v2042 = vld [vmem:[#allocation8 + $0x2a0] sm:$0xff]
        %v2043 = vld [vmem:[#allocation8 + $0x2a8] sm:$0xff]
        %v2044 = vld [vmem:[#allocation8 + $0x2b0] sm:$0xff]
        %v2045 = vld [vmem:[#allocation8 + $0x2b8] sm:$0xff]
        %v2046 = vld [vmem:[#allocation8 + $0x2c0] sm:$0xff]
        %v2047 = vld [vmem:[#allocation8 + $0x2c8] sm:$0xff]
        %v2048 = vld [vmem:[#allocation8 + $0x2d0] sm:$0xff]
        %v2049 = vld [vmem:[#allocation8 + $0x2d8] sm:$0xff]
        %v2050 = vld [vmem:[#allocation8 + $0x2e0] sm:$0xff]
        %v2051 = vld [vmem:[#allocation8 + $0x2e8] sm:$0xff]
        %v2052 = vld [vmem:[#allocation8 + $0x2f0] sm:$0xff]
        %v2053 = vld [vmem:[#allocation8 + $0x2f8] sm:$0xff]
        %v2054 = vld [vmem:[#allocation8 + $0x300] sm:$0xff]
        %v2055 = vld [vmem:[#allocation8 + $0x308] sm:$0xff]
        %v2056 = vld [vmem:[#allocation8 + $0x310] sm:$0xff]
        %v2057 = vld [vmem:[#allocation8 + $0x318] sm:$0xff]
        %v2058 = vld [vmem:[#allocation8 + $0x320] sm:$0xff]
        %v2059 = vld [vmem:[#allocation8 + $0x328] sm:$0xff]
        %v2060 = vld [vmem:[#allocation8 + $0x330] sm:$0xff]
        %v2061 = vld [vmem:[#allocation8 + $0x338] sm:$0xff]
        %v2062 = vld [vmem:[#allocation8 + $0x340] sm:$0xff]
        %v2063 = vld [vmem:[#allocation8 + $0x348] sm:$0xff]
        %v2064 = vld [vmem:[#allocation8 + $0x350] sm:$0xff]
        %v2065 = vld [vmem:[#allocation8 + $0x358] sm:$0xff]
        %v2066 = vld [vmem:[#allocation8 + $0x360] sm:$0xff]
        %v2067 = vld [vmem:[#allocation8 + $0x368] sm:$0xff]
        %v2068 = vld [vmem:[#allocation8 + $0x370] sm:$0xff]
        %v2069 = vld [vmem:[#allocation8 + $0x378] sm:$0xff]
        %v2070 = vld [vmem:[#allocation8 + $0x380] sm:$0xff]
        %v2071 = vld [vmem:[#allocation8 + $0x388] sm:$0xff]
        %v2072 = vld [vmem:[#allocation8 + $0x390] sm:$0xff]
        %v2073 = vld [vmem:[#allocation8 + $0x398] sm:$0xff]
        %v2074 = vld [vmem:[#allocation8 + $0x3a0] sm:$0xff]
        %v2075 = vld [vmem:[#allocation8 + $0x3a8] sm:$0xff]
        %v2076 = vld [vmem:[#allocation8 + $0x3b0] sm:$0xff]
        %v2077 = vld [vmem:[#allocation8 + $0x3b8] sm:$0xff]
        %v2078 = vld [vmem:[#allocation8 + $0x3c0] sm:$0xff]
        %v2079 = vld [vmem:[#allocation8 + $0x3c8] sm:$0xff]
        %v2080 = vld [vmem:[#allocation8 + $0x3d0] sm:$0xff]
        %v2081 = vld [vmem:[#allocation8 + $0x3d8] sm:$0xff]
        %v2082 = vld [vmem:[#allocation8 + $0x3e0] sm:$0xff]
        %v2083 = vld [vmem:[#allocation8 + $0x3e8] sm:$0xff]
        %v2084 = vld [vmem:[#allocation8 + $0x3f0] sm:$0xff]
        %v2085 = vld [vmem:[#allocation8 + $0x3f8] sm:$0xff]
        %v2086 = vld [vmem:[%s4] sm:$0xf]
        %v2088 = vlaneseq
        %v2089 = vshrl.u32 %v2088, 7
        %v2090 = vsub.s32 0, %v2089
        %v2091 = vrot.slane %v2086, %v2090
        %v2092 = vlaneseq
        %v2093 = vshrl.u32 %v2092, 7
        %v2094 = vsub.s32 1, %v2093
        %v2095 = vrot.slane %v2086, %v2094
        %v2096 = vlaneseq
        %v2097 = vshrl.u32 %v2096, 7
        %v2098 = vsub.s32 2, %v2097
        %v2099 = vrot.slane %v2086, %v2098
        %v2100 = vlaneseq
        %v2101 = vshrl.u32 %v2100, 7
        %v2102 = vsub.s32 3, %v2101
        %v2103 = vrot.slane %v2086, %v2102
        %v2236 = vunpack.c.l.b16 %v1958
        %v2237 = vunpack.c.h.b16 %v1958
        %v2238 = vunpack.c.l.b16 %v1959
        %v2239 = vunpack.c.h.b16 %v1959
        %v2240 = vunpack.c.l.b16 %v1960
        %v2241 = vunpack.c.h.b16 %v1960
        %v2242 = vunpack.c.l.b16 %v1961
        %v2243 = vunpack.c.h.b16 %v1961
        %v2244 = vunpack.c.l.b16 %v1962
        %v2245 = vunpack.c.h.b16 %v1962
        %v2246 = vunpack.c.l.b16 %v1963
        %v2247 = vunpack.c.h.b16 %v1963
        %v2248 = vunpack.c.l.b16 %v1964
        %v2249 = vunpack.c.h.b16 %v1964
        %v2250 = vunpack.c.l.b16 %v1965
        %v2251 = vunpack.c.h.b16 %v1965
        %v2252 = vunpack.c.l.b16 %v1966
        %v2253 = vunpack.c.h.b16 %v1966
        %v2254 = vunpack.c.l.b16 %v1967
        %v2255 = vunpack.c.h.b16 %v1967
        %v2256 = vunpack.c.l.b16 %v1968
        %v2257 = vunpack.c.h.b16 %v1968
        %v2258 = vunpack.c.l.b16 %v1969
        %v2259 = vunpack.c.h.b16 %v1969
        %v2260 = vunpack.c.l.b16 %v1970
        %v2261 = vunpack.c.h.b16 %v1970
        %v2262 = vunpack.c.l.b16 %v1971
        %v2263 = vunpack.c.h.b16 %v1971
        %v2264 = vunpack.c.l.b16 %v1972
        %v2265 = vunpack.c.h.b16 %v1972
        %v2266 = vunpack.c.l.b16 %v1973
        %v2267 = vunpack.c.h.b16 %v1973
        %v2268 = vunpack.c.l.b16 %v1974
        %v2269 = vunpack.c.h.b16 %v1974
        %v2270 = vunpack.c.l.b16 %v1975
        %v2271 = vunpack.c.h.b16 %v1975
        %v2272 = vunpack.c.l.b16 %v1976
        %v2273 = vunpack.c.h.b16 %v1976
        %v2274 = vunpack.c.l.b16 %v1977
        %v2275 = vunpack.c.h.b16 %v1977
        %v2276 = vunpack.c.l.b16 %v1978
        %v2277 = vunpack.c.h.b16 %v1978
        %v2278 = vunpack.c.l.b16 %v1979
        %v2279 = vunpack.c.h.b16 %v1979
        %v2280 = vunpack.c.l.b16 %v1980
        %v2281 = vunpack.c.h.b16 %v1980
        %v2282 = vunpack.c.l.b16 %v1981
        %v2283 = vunpack.c.h.b16 %v1981
        %v2284 = vunpack.c.l.b16 %v1982
        %v2285 = vunpack.c.h.b16 %v1982
        %v2286 = vunpack.c.l.b16 %v1983
        %v2287 = vunpack.c.h.b16 %v1983
        %v2288 = vunpack.c.l.b16 %v1984
        %v2289 = vunpack.c.h.b16 %v1984
        %v2290 = vunpack.c.l.b16 %v1985
        %v2291 = vunpack.c.h.b16 %v1985
        %v2292 = vunpack.c.l.b16 %v1986
        %v2293 = vunpack.c.h.b16 %v1986
        %v2294 = vunpack.c.l.b16 %v1987
        %v2295 = vunpack.c.h.b16 %v1987
        %v2296 = vunpack.c.l.b16 %v1988
        %v2297 = vunpack.c.h.b16 %v1988
        %v2298 = vunpack.c.l.b16 %v1989
        %v2299 = vunpack.c.h.b16 %v1989
        %v2300 = vunpack.c.l.b16 %v1990
        %v2301 = vunpack.c.h.b16 %v1990
        %v2302 = vunpack.c.l.b16 %v1991
        %v2303 = vunpack.c.h.b16 %v1991
        %v2304 = vunpack.c.l.b16 %v1992
        %v2305 = vunpack.c.h.b16 %v1992
        %v2306 = vunpack.c.l.b16 %v1993
        %v2307 = vunpack.c.h.b16 %v1993
        %v2308 = vunpack.c.l.b16 %v1994
        %v2309 = vunpack.c.h.b16 %v1994
        %v2310 = vunpack.c.l.b16 %v1995
        %v2311 = vunpack.c.h.b16 %v1995
        %v2312 = vunpack.c.l.b16 %v1996
        %v2313 = vunpack.c.h.b16 %v1996
        %v2314 = vunpack.c.l.b16 %v1997
        %v2315 = vunpack.c.h.b16 %v1997
        %v2316 = vunpack.c.l.b16 %v1998
        %v2317 = vunpack.c.h.b16 %v1998
        %v2318 = vunpack.c.l.b16 %v1999
        %v2319 = vunpack.c.h.b16 %v1999
        %v2320 = vunpack.c.l.b16 %v2000
        %v2321 = vunpack.c.h.b16 %v2000
        %v2322 = vunpack.c.l.b16 %v2001
        %v2323 = vunpack.c.h.b16 %v2001
        %v2324 = vunpack.c.l.b16 %v2002
        %v2325 = vunpack.c.h.b16 %v2002
        %v2326 = vunpack.c.l.b16 %v2003
        %v2327 = vunpack.c.h.b16 %v2003
        %v2328 = vunpack.c.l.b16 %v2004
        %v2329 = vunpack.c.h.b16 %v2004
        %v2330 = vunpack.c.l.b16 %v2005
        %v2331 = vunpack.c.h.b16 %v2005
        %v2332 = vunpack.c.l.b16 %v2006
        %v2333 = vunpack.c.h.b16 %v2006
        %v2334 = vunpack.c.l.b16 %v2007
        %v2335 = vunpack.c.h.b16 %v2007
        %v2336 = vunpack.c.l.b16 %v2008
        %v2337 = vunpack.c.h.b16 %v2008
        %v2338 = vunpack.c.l.b16 %v2009
        %v2339 = vunpack.c.h.b16 %v2009
        %v2340 = vunpack.c.l.b16 %v2010
        %v2341 = vunpack.c.h.b16 %v2010
        %v2342 = vunpack.c.l.b16 %v2011
        %v2343 = vunpack.c.h.b16 %v2011
        %v2344 = vunpack.c.l.b16 %v2012
        %v2345 = vunpack.c.h.b16 %v2012
        %v2346 = vunpack.c.l.b16 %v2013
        %v2347 = vunpack.c.h.b16 %v2013
        %v2348 = vunpack.c.l.b16 %v2014
        %v2349 = vunpack.c.h.b16 %v2014
        %v2350 = vunpack.c.l.b16 %v2015
        %v2351 = vunpack.c.h.b16 %v2015
        %v2352 = vunpack.c.l.b16 %v2016
        %v2353 = vunpack.c.h.b16 %v2016
        %v2354 = vunpack.c.l.b16 %v2017
        %v2355 = vunpack.c.h.b16 %v2017
        %v2356 = vunpack.c.l.b16 %v2018
        %v2357 = vunpack.c.h.b16 %v2018
        %v2358 = vunpack.c.l.b16 %v2019
        %v2359 = vunpack.c.h.b16 %v2019
        %v2360 = vunpack.c.l.b16 %v2020
        %v2361 = vunpack.c.h.b16 %v2020
        %v2362 = vunpack.c.l.b16 %v2021
        %v2363 = vunpack.c.h.b16 %v2021
        %v2364 = vunpack.c.l.b16 %v2022
        %v2365 = vunpack.c.h.b16 %v2022
        %v2366 = vunpack.c.l.b16 %v2023
        %v2367 = vunpack.c.h.b16 %v2023
        %v2368 = vunpack.c.l.b16 %v2024
        %v2369 = vunpack.c.h.b16 %v2024
        %v2370 = vunpack.c.l.b16 %v2025
        %v2371 = vunpack.c.h.b16 %v2025
        %v2372 = vunpack.c.l.b16 %v2026
        %v2373 = vunpack.c.h.b16 %v2026
        %v2374 = vunpack.c.l.b16 %v2027
        %v2375 = vunpack.c.h.b16 %v2027
        %v2376 = vunpack.c.l.b16 %v2028
        %v2377 = vunpack.c.h.b16 %v2028
        %v2378 = vunpack.c.l.b16 %v2029
        %v2379 = vunpack.c.h.b16 %v2029
        %v2380 = vunpack.c.l.b16 %v2030
        %v2381 = vunpack.c.h.b16 %v2030
        %v2382 = vunpack.c.l.b16 %v2031
        %v2383 = vunpack.c.h.b16 %v2031
        %v2384 = vunpack.c.l.b16 %v2032
        %v2385 = vunpack.c.h.b16 %v2032
        %v2386 = vunpack.c.l.b16 %v2033
        %v2387 = vunpack.c.h.b16 %v2033
        %v2388 = vunpack.c.l.b16 %v2034
        %v2389 = vunpack.c.h.b16 %v2034
        %v2390 = vunpack.c.l.b16 %v2035
        %v2391 = vunpack.c.h.b16 %v2035
        %v2392 = vunpack.c.l.b16 %v2036
        %v2393 = vunpack.c.h.b16 %v2036
        %v2394 = vunpack.c.l.b16 %v2037
        %v2395 = vunpack.c.h.b16 %v2037
        %v2396 = vunpack.c.l.b16 %v2038
        %v2397 = vunpack.c.h.b16 %v2038
        %v2398 = vunpack.c.l.b16 %v2039
        %v2399 = vunpack.c.h.b16 %v2039
        %v2400 = vunpack.c.l.b16 %v2040
        %v2401 = vunpack.c.h.b16 %v2040
        %v2402 = vunpack.c.l.b16 %v2041
        %v2403 = vunpack.c.h.b16 %v2041
        %v2404 = vunpack.c.l.b16 %v2042
        %v2405 = vunpack.c.h.b16 %v2042
        %v2406 = vunpack.c.l.b16 %v2043
        %v2407 = vunpack.c.h.b16 %v2043
        %v2408 = vunpack.c.l.b16 %v2044
        %v2409 = vunpack.c.h.b16 %v2044
        %v2410 = vunpack.c.l.b16 %v2045
        %v2411 = vunpack.c.h.b16 %v2045
        %v2412 = vunpack.c.l.b16 %v2046
        %v2413 = vunpack.c.h.b16 %v2046
        %v2414 = vunpack.c.l.b16 %v2047
        %v2415 = vunpack.c.h.b16 %v2047
        %v2416 = vunpack.c.l.b16 %v2048
        %v2417 = vunpack.c.h.b16 %v2048
        %v2418 = vunpack.c.l.b16 %v2049
        %v2419 = vunpack.c.h.b16 %v2049
        %v2420 = vunpack.c.l.b16 %v2050
        %v2421 = vunpack.c.h.b16 %v2050
        %v2422 = vunpack.c.l.b16 %v2051
        %v2423 = vunpack.c.h.b16 %v2051
        %v2424 = vunpack.c.l.b16 %v2052
        %v2425 = vunpack.c.h.b16 %v2052
        %v2426 = vunpack.c.l.b16 %v2053
        %v2427 = vunpack.c.h.b16 %v2053
        %v2428 = vunpack.c.l.b16 %v2054
        %v2429 = vunpack.c.h.b16 %v2054
        %v2430 = vunpack.c.l.b16 %v2055
        %v2431 = vunpack.c.h.b16 %v2055
        %v2432 = vunpack.c.l.b16 %v2056
        %v2433 = vunpack.c.h.b16 %v2056
        %v2434 = vunpack.c.l.b16 %v2057
        %v2435 = vunpack.c.h.b16 %v2057
        %v2436 = vunpack.c.l.b16 %v2058
        %v2437 = vunpack.c.h.b16 %v2058
        %v2438 = vunpack.c.l.b16 %v2059
        %v2439 = vunpack.c.h.b16 %v2059
        %v2440 = vunpack.c.l.b16 %v2060
        %v2441 = vunpack.c.h.b16 %v2060
        %v2442 = vunpack.c.l.b16 %v2061
        %v2443 = vunpack.c.h.b16 %v2061
        %v2444 = vunpack.c.l.b16 %v2062
        %v2445 = vunpack.c.h.b16 %v2062
        %v2446 = vunpack.c.l.b16 %v2063
        %v2447 = vunpack.c.h.b16 %v2063
        %v2448 = vunpack.c.l.b16 %v2064
        %v2449 = vunpack.c.h.b16 %v2064
        %v2450 = vunpack.c.l.b16 %v2065
        %v2451 = vunpack.c.h.b16 %v2065
        %v2452 = vunpack.c.l.b16 %v2066
        %v2453 = vunpack.c.h.b16 %v2066
        %v2454 = vunpack.c.l.b16 %v2067
        %v2455 = vunpack.c.h.b16 %v2067
        %v2456 = vunpack.c.l.b16 %v2068
        %v2457 = vunpack.c.h.b16 %v2068
        %v2458 = vunpack.c.l.b16 %v2069
        %v2459 = vunpack.c.h.b16 %v2069
        %v2460 = vunpack.c.l.b16 %v2070
        %v2461 = vunpack.c.h.b16 %v2070
        %v2462 = vunpack.c.l.b16 %v2071
        %v2463 = vunpack.c.h.b16 %v2071
        %v2464 = vunpack.c.l.b16 %v2072
        %v2465 = vunpack.c.h.b16 %v2072
        %v2466 = vunpack.c.l.b16 %v2073
        %v2467 = vunpack.c.h.b16 %v2073
        %v2468 = vunpack.c.l.b16 %v2074
        %v2469 = vunpack.c.h.b16 %v2074
        %v2470 = vunpack.c.l.b16 %v2075
        %v2471 = vunpack.c.h.b16 %v2075
        %v2472 = vunpack.c.l.b16 %v2076
        %v2473 = vunpack.c.h.b16 %v2076
        %v2474 = vunpack.c.l.b16 %v2077
        %v2475 = vunpack.c.h.b16 %v2077
        %v2476 = vunpack.c.l.b16 %v2078
        %v2477 = vunpack.c.h.b16 %v2078
        %v2478 = vunpack.c.l.b16 %v2079
        %v2479 = vunpack.c.h.b16 %v2079
        %v2480 = vunpack.c.l.b16 %v2080
        %v2481 = vunpack.c.h.b16 %v2080
        %v2482 = vunpack.c.l.b16 %v2081
        %v2483 = vunpack.c.h.b16 %v2081
        %v2484 = vunpack.c.l.b16 %v2082
        %v2485 = vunpack.c.h.b16 %v2082
        %v2486 = vunpack.c.l.b16 %v2083
        %v2487 = vunpack.c.h.b16 %v2083
        %v2488 = vunpack.c.l.b16 %v2084
        %v2489 = vunpack.c.h.b16 %v2084
        %v2490 = vunpack.c.l.b16 %v2085
        %v2491 = vunpack.c.h.b16 %v2085
        %v2492 = vpack.c.b16 %v2240, %v2236
        %v2493 = vpack.c.b16 %v2241, %v2237
        %v2494 = vpack.c.b16 %v2242, %v2238
        %v2495 = vpack.c.b16 %v2243, %v2239
        %v2496 = vpack.c.b16 %v2248, %v2244
        %v2497 = vpack.c.b16 %v2249, %v2245
        %v2498 = vpack.c.b16 %v2250, %v2246
        %v2499 = vpack.c.b16 %v2251, %v2247
        %v2500 = vpack.c.b16 %v2256, %v2252
        %v2501 = vpack.c.b16 %v2257, %v2253
        %v2502 = vpack.c.b16 %v2258, %v2254
        %v2503 = vpack.c.b16 %v2259, %v2255
        %v2504 = vpack.c.b16 %v2264, %v2260
        %v2505 = vpack.c.b16 %v2265, %v2261
        %v2506 = vpack.c.b16 %v2266, %v2262
        %v2507 = vpack.c.b16 %v2267, %v2263
        %v2508 = vpack.c.b16 %v2272, %v2268
        %v2509 = vpack.c.b16 %v2273, %v2269
        %v2510 = vpack.c.b16 %v2274, %v2270
        %v2511 = vpack.c.b16 %v2275, %v2271
        %v2512 = vpack.c.b16 %v2280, %v2276
        %v2513 = vpack.c.b16 %v2281, %v2277
        %v2514 = vpack.c.b16 %v2282, %v2278
        %v2515 = vpack.c.b16 %v2283, %v2279
        %v2516 = vpack.c.b16 %v2288, %v2284
        %v2517 = vpack.c.b16 %v2289, %v2285
        %v2518 = vpack.c.b16 %v2290, %v2286
        %v2519 = vpack.c.b16 %v2291, %v2287
        %v2520 = vpack.c.b16 %v2296, %v2292
        %v2521 = vpack.c.b16 %v2297, %v2293
        %v2522 = vpack.c.b16 %v2298, %v2294
        %v2523 = vpack.c.b16 %v2299, %v2295
        %v2524 = vpack.c.b16 %v2304, %v2300
        %v2525 = vpack.c.b16 %v2305, %v2301
        %v2526 = vpack.c.b16 %v2306, %v2302
        %v2527 = vpack.c.b16 %v2307, %v2303
        %v2528 = vpack.c.b16 %v2312, %v2308
        %v2529 = vpack.c.b16 %v2313, %v2309
        %v2530 = vpack.c.b16 %v2314, %v2310
        %v2531 = vpack.c.b16 %v2315, %v2311
        %v2532 = vpack.c.b16 %v2320, %v2316
        %v2533 = vpack.c.b16 %v2321, %v2317
        %v2534 = vpack.c.b16 %v2322, %v2318
        %v2535 = vpack.c.b16 %v2323, %v2319
        %v2536 = vpack.c.b16 %v2328, %v2324
        %v2537 = vpack.c.b16 %v2329, %v2325
        %v2538 = vpack.c.b16 %v2330, %v2326
        %v2539 = vpack.c.b16 %v2331, %v2327
        %v2540 = vpack.c.b16 %v2336, %v2332
        %v2541 = vpack.c.b16 %v2337, %v2333
        %v2542 = vpack.c.b16 %v2338, %v2334
        %v2543 = vpack.c.b16 %v2339, %v2335
        %v2544 = vpack.c.b16 %v2344, %v2340
        %v2545 = vpack.c.b16 %v2345, %v2341
        %v2546 = vpack.c.b16 %v2346, %v2342
        %v2547 = vpack.c.b16 %v2347, %v2343
        %v2548 = vpack.c.b16 %v2352, %v2348
        %v2549 = vpack.c.b16 %v2353, %v2349
        %v2550 = vpack.c.b16 %v2354, %v2350
        %v2551 = vpack.c.b16 %v2355, %v2351
        %v2552 = vpack.c.b16 %v2360, %v2356
        %v2553 = vpack.c.b16 %v2361, %v2357
        %v2554 = vpack.c.b16 %v2362, %v2358
        %v2555 = vpack.c.b16 %v2363, %v2359
        %v2556 = vpack.c.b16 %v2368, %v2364
        %v2557 = vpack.c.b16 %v2369, %v2365
        %v2558 = vpack.c.b16 %v2370, %v2366
        %v2559 = vpack.c.b16 %v2371, %v2367
        %v2560 = vpack.c.b16 %v2376, %v2372
        %v2561 = vpack.c.b16 %v2377, %v2373
        %v2562 = vpack.c.b16 %v2378, %v2374
        %v2563 = vpack.c.b16 %v2379, %v2375
        %v2564 = vpack.c.b16 %v2384, %v2380
        %v2565 = vpack.c.b16 %v2385, %v2381
        %v2566 = vpack.c.b16 %v2386, %v2382
        %v2567 = vpack.c.b16 %v2387, %v2383
        %v2568 = vpack.c.b16 %v2392, %v2388
        %v2569 = vpack.c.b16 %v2393, %v2389
        %v2570 = vpack.c.b16 %v2394, %v2390
        %v2571 = vpack.c.b16 %v2395, %v2391
        %v2572 = vpack.c.b16 %v2400, %v2396
        %v2573 = vpack.c.b16 %v2401, %v2397
        %v2574 = vpack.c.b16 %v2402, %v2398
        %v2575 = vpack.c.b16 %v2403, %v2399
        %v2576 = vpack.c.b16 %v2408, %v2404
        %v2577 = vpack.c.b16 %v2409, %v2405
        %v2578 = vpack.c.b16 %v2410, %v2406
        %v2579 = vpack.c.b16 %v2411, %v2407
        %v2580 = vpack.c.b16 %v2416, %v2412
        %v2581 = vpack.c.b16 %v2417, %v2413
        %v2582 = vpack.c.b16 %v2418, %v2414
        %v2583 = vpack.c.b16 %v2419, %v2415
        %v2584 = vpack.c.b16 %v2424, %v2420
        %v2585 = vpack.c.b16 %v2425, %v2421
        %v2586 = vpack.c.b16 %v2426, %v2422
        %v2587 = vpack.c.b16 %v2427, %v2423
        %v2588 = vpack.c.b16 %v2432, %v2428
        %v2589 = vpack.c.b16 %v2433, %v2429
        %v2590 = vpack.c.b16 %v2434, %v2430
        %v2591 = vpack.c.b16 %v2435, %v2431
        %v2592 = vpack.c.b16 %v2440, %v2436
        %v2593 = vpack.c.b16 %v2441, %v2437
        %v2594 = vpack.c.b16 %v2442, %v2438
        %v2595 = vpack.c.b16 %v2443, %v2439
        %v2596 = vpack.c.b16 %v2448, %v2444
        %v2597 = vpack.c.b16 %v2449, %v2445
        %v2598 = vpack.c.b16 %v2450, %v2446
        %v2599 = vpack.c.b16 %v2451, %v2447
        %v2600 = vpack.c.b16 %v2456, %v2452
        %v2601 = vpack.c.b16 %v2457, %v2453
        %v2602 = vpack.c.b16 %v2458, %v2454
        %v2603 = vpack.c.b16 %v2459, %v2455
        %v2604 = vpack.c.b16 %v2464, %v2460
        %v2605 = vpack.c.b16 %v2465, %v2461
        %v2606 = vpack.c.b16 %v2466, %v2462
        %v2607 = vpack.c.b16 %v2467, %v2463
        %v2608 = vpack.c.b16 %v2472, %v2468
        %v2609 = vpack.c.b16 %v2473, %v2469
        %v2610 = vpack.c.b16 %v2474, %v2470
        %v2611 = vpack.c.b16 %v2475, %v2471
        %v2612 = vpack.c.b16 %v2480, %v2476
        %v2613 = vpack.c.b16 %v2481, %v2477
        %v2614 = vpack.c.b16 %v2482, %v2478
        %v2615 = vpack.c.b16 %v2483, %v2479
        %v2616 = vpack.c.b16 %v2488, %v2484
        %v2617 = vpack.c.b16 %v2489, %v2485
        %v2618 = vpack.c.b16 %v2490, %v2486
        %v2619 = vpack.c.b16 %v2491, %v2487
        %2748 = vmatprep.subr.bf16.mxu0 %v2521
        %2749 = vmatpush1.bf16.msra.mxu0 %v2520
        %2750 = vmatprep.subr.bf16.mxu0 %v2517
        %2751 = vmatpush1.bf16.msra.mxu0 %v2516
        %2752 = vmatprep.subr.bf16.mxu0 %v2513
        %2753 = vmatpush1.bf16.msra.mxu0 %v2512
        %2754 = vmatprep.subr.bf16.mxu0 %v2509
        %2755 = vmatpush1.bf16.msra.mxu0 %v2508
        %2756 = vmatprep.subr.bf16.mxu0 %v2505
        %2757 = vmatpush1.bf16.msra.mxu0 %v2504
        %2758 = vmatprep.subr.bf16.mxu0 %v2501
        %2759 = vmatpush1.bf16.msra.mxu0 %v2500
        %2760 = vmatprep.subr.bf16.mxu0 %v2497
        %2761 = vmatpush1.bf16.msra.mxu0 %v2496
        %2762 = vmatprep.subr.bf16.mxu0 %v2493
        %2763 = vmatpush1.bf16.msra.mxu0 %v2492
        %2764 = vmatprep.subr.bf16.mxu0 %v2553
        %2765 = vmatpush2.bf16.msra.mxu0 %v2552
        %2766 = vmatprep.subr.bf16.mxu0 %v2549
        %2767 = vmatpush2.bf16.msra.mxu0 %v2548
        %2768 = vmatprep.subr.bf16.mxu0 %v2545
        %2769 = vmatpush2.bf16.msra.mxu0 %v2544
        %2770 = vmatprep.subr.bf16.mxu0 %v2541
        %2771 = vmatpush2.bf16.msra.mxu0 %v2540
        %2772 = vmatprep.subr.bf16.mxu0 %v2537
        %2773 = vmatpush2.bf16.msra.mxu0 %v2536
        %2774 = vmatprep.subr.bf16.mxu0 %v2533
        %2775 = vmatpush2.bf16.msra.mxu0 %v2532
        %2776 = vmatprep.subr.bf16.mxu0 %v2529
        %2777 = vmatpush2.bf16.msra.mxu0 %v2528
        %2778 = vmatprep.subr.bf16.mxu0 %v2525
        %2779 = vmatpush2.bf16.msra.mxu0 %v2524
        %2780 = vmatprep.mubr.bf16.mxu0 %v1955
        %2781 = vmatmul.mubr.bf16.gmra.mxu0 %v1954
        %v2782 = vpop.f32.mrf.mxu0
        %v2783 = vadd.f32 %v2091, %v2782
        %v2784 = vpop.f32.mrf.mxu0
        %v2785 = vadd.f32 %v2095, %v2784
        %v2786 = vpop.f32.mrf.mxu0
        %v2787 = vadd.f32 %v2091, %v2786
        %v2788 = vpop.f32.mrf.mxu0
        %v2789 = vadd.f32 %v2095, %v2788
        %2790 = vdwg.mxu0
        %2791 = vmatprep.subr.bf16.mxu0 %v2585
        %2792 = vmatpush1.bf16.msra.mxu0 %v2584
        %2793 = vmatprep.subr.bf16.mxu0 %v2581
        %2794 = vmatpush1.bf16.msra.mxu0 %v2580
        %2795 = vmatprep.subr.bf16.mxu0 %v2577
        %2796 = vmatpush1.bf16.msra.mxu0 %v2576
        %2797 = vmatprep.subr.bf16.mxu0 %v2573
        %2798 = vmatpush1.bf16.msra.mxu0 %v2572
        %2799 = vmatprep.subr.bf16.mxu0 %v2569
        %2800 = vmatpush1.bf16.msra.mxu0 %v2568
        %2801 = vmatprep.subr.bf16.mxu0 %v2565
        %2802 = vmatpush1.bf16.msra.mxu0 %v2564
        %2803 = vmatprep.subr.bf16.mxu0 %v2561
        %2804 = vmatpush1.bf16.msra.mxu0 %v2560
        %2805 = vmatprep.subr.bf16.mxu0 %v2557
        %2806 = vmatpush1.bf16.msra.mxu0 %v2556
        %2807 = vmatprep.subr.bf16.mxu0 %v2617
        %2808 = vmatpush2.bf16.msra.mxu0 %v2616
        %2809 = vmatprep.subr.bf16.mxu0 %v2613
        %2810 = vmatpush2.bf16.msra.mxu0 %v2612
        %2811 = vmatprep.subr.bf16.mxu0 %v2609
        %2812 = vmatpush2.bf16.msra.mxu0 %v2608
        %2813 = vmatprep.subr.bf16.mxu0 %v2605
        %2814 = vmatpush2.bf16.msra.mxu0 %v2604
        %2815 = vmatprep.subr.bf16.mxu0 %v2601
        %2816 = vmatpush2.bf16.msra.mxu0 %v2600
        %2817 = vmatprep.subr.bf16.mxu0 %v2597
        %2818 = vmatpush2.bf16.msra.mxu0 %v2596
        %2819 = vmatprep.subr.bf16.mxu0 %v2593
        %2820 = vmatpush2.bf16.msra.mxu0 %v2592
        %2821 = vmatprep.subr.bf16.mxu0 %v2589
        %2822 = vmatpush2.bf16.msra.mxu0 %v2588
        %2823 = vmatprep.mubr.bf16.mxu0 %v1957
        %2824 = vmatmul.mubr.bf16.gmra.mxu0 %v1956
        %v2825 = vpop.f32.mrf.mxu0
        %v2826 = vadd.f32 %v2783, %v2825
        %v2827 = vpop.f32.mrf.mxu0
        %v2828 = vadd.f32 %v2785, %v2827
        %v2829 = vpop.f32.mrf.mxu0
        %v2830 = vadd.f32 %v2787, %v2829
        %v2831 = vpop.f32.mrf.mxu0
        %v2832 = vadd.f32 %v2789, %v2831
        %2833 = vdwg.mxu0
        %2834 = vmatprep.subr.bf16.mxu0 %v2523
        %2835 = vmatpush1.bf16.msra.mxu0 %v2522
        %2836 = vmatprep.subr.bf16.mxu0 %v2519
        %2837 = vmatpush1.bf16.msra.mxu0 %v2518
        %2838 = vmatprep.subr.bf16.mxu0 %v2515
        %2839 = vmatpush1.bf16.msra.mxu0 %v2514
        %2840 = vmatprep.subr.bf16.mxu0 %v2511
        %2841 = vmatpush1.bf16.msra.mxu0 %v2510
        %2842 = vmatprep.subr.bf16.mxu0 %v2507
        %2843 = vmatpush1.bf16.msra.mxu0 %v2506
        %2844 = vmatprep.subr.bf16.mxu0 %v2503
        %2845 = vmatpush1.bf16.msra.mxu0 %v2502
        %2846 = vmatprep.subr.bf16.mxu0 %v2499
        %2847 = vmatpush1.bf16.msra.mxu0 %v2498
        %2848 = vmatprep.subr.bf16.mxu0 %v2495
        %2849 = vmatpush1.bf16.msra.mxu0 %v2494
        %2850 = vmatprep.subr.bf16.mxu0 %v2555
        %2851 = vmatpush2.bf16.msra.mxu0 %v2554
        %2852 = vmatprep.subr.bf16.mxu0 %v2551
        %2853 = vmatpush2.bf16.msra.mxu0 %v2550
        %2854 = vmatprep.subr.bf16.mxu0 %v2547
        %2855 = vmatpush2.bf16.msra.mxu0 %v2546
        %2856 = vmatprep.subr.bf16.mxu0 %v2543
        %2857 = vmatpush2.bf16.msra.mxu0 %v2542
        %2858 = vmatprep.subr.bf16.mxu0 %v2539
        %2859 = vmatpush2.bf16.msra.mxu0 %v2538
        %2860 = vmatprep.subr.bf16.mxu0 %v2535
        %2861 = vmatpush2.bf16.msra.mxu0 %v2534
        %2862 = vmatprep.subr.bf16.mxu0 %v2531
        %2863 = vmatpush2.bf16.msra.mxu0 %v2530
        %2864 = vmatprep.subr.bf16.mxu0 %v2527
        %2865 = vmatpush2.bf16.msra.mxu0 %v2526
        %2866 = vmatprep.mubr.bf16.mxu0 %v1955
        %2867 = vmatmul.mubr.bf16.gmra.mxu0 %v1954
        %v2868 = vpop.f32.mrf.mxu0
        %v2869 = vadd.f32 %v2099, %v2868
        %v2870 = vpop.f32.mrf.mxu0
        %v2871 = vadd.f32 %v2103, %v2870
        %v2872 = vpop.f32.mrf.mxu0
        %v2873 = vadd.f32 %v2099, %v2872
        %v2874 = vpop.f32.mrf.mxu0
        %v2875 = vadd.f32 %v2103, %v2874
        %2876 = vdwg.mxu0
        %2877 = vmatprep.subr.bf16.mxu0 %v2587
        %2878 = vmatpush1.bf16.msra.mxu0 %v2586
        %2879 = vmatprep.subr.bf16.mxu0 %v2583
        %2880 = vmatpush1.bf16.msra.mxu0 %v2582
        %2881 = vmatprep.subr.bf16.mxu0 %v2579
        %2882 = vmatpush1.bf16.msra.mxu0 %v2578
        %2883 = vmatprep.subr.bf16.mxu0 %v2575
        %2884 = vmatpush1.bf16.msra.mxu0 %v2574
        %2885 = vmatprep.subr.bf16.mxu0 %v2571
        %2886 = vmatpush1.bf16.msra.mxu0 %v2570
        %2887 = vmatprep.subr.bf16.mxu0 %v2567
        %2888 = vmatpush1.bf16.msra.mxu0 %v2566
        %2889 = vmatprep.subr.bf16.mxu0 %v2563
        %2890 = vmatpush1.bf16.msra.mxu0 %v2562
        %2891 = vmatprep.subr.bf16.mxu0 %v2559
        %2892 = vmatpush1.bf16.msra.mxu0 %v2558
        %2893 = vmatprep.subr.bf16.mxu0 %v2619
        %2894 = vmatpush2.bf16.msra.mxu0 %v2618
        %2895 = vmatprep.subr.bf16.mxu0 %v2615
        %2896 = vmatpush2.bf16.msra.mxu0 %v2614
        %2897 = vmatprep.subr.bf16.mxu0 %v2611
        %2898 = vmatpush2.bf16.msra.mxu0 %v2610
        %2899 = vmatprep.subr.bf16.mxu0 %v2607
        %2900 = vmatpush2.bf16.msra.mxu0 %v2606
        %2901 = vmatprep.subr.bf16.mxu0 %v2603
        %2902 = vmatpush2.bf16.msra.mxu0 %v2602
        %2903 = vmatprep.subr.bf16.mxu0 %v2599
        %2904 = vmatpush2.bf16.msra.mxu0 %v2598
        %2905 = vmatprep.subr.bf16.mxu0 %v2595
        %2906 = vmatpush2.bf16.msra.mxu0 %v2594
        %2907 = vmatprep.subr.bf16.mxu0 %v2591
        %2908 = vmatpush2.bf16.msra.mxu0 %v2590
        %2909 = vmatprep.mubr.bf16.mxu0 %v1957
        %2910 = vmatmul.mubr.bf16.gmra.mxu0 %v1956
        %v2911 = vpop.f32.mrf.mxu0
        %v2912 = vadd.f32 %v2869, %v2911
        %v2913 = vpop.f32.mrf.mxu0
        %v2914 = vadd.f32 %v2871, %v2913
        %v2915 = vpop.f32.mrf.mxu0
        %v2916 = vadd.f32 %v2873, %v2915
        %v2917 = vpop.f32.mrf.mxu0
        %v2918 = vadd.f32 %v2875, %v2917
        %2919 = vdwg.mxu0
        %v2920 = vmax.f32 %v2826, 0.0
        %v2921 = vmax.f32 %v2828, 0.0
        %v2922 = vmax.f32 %v2912, 0.0
        %v2923 = vmax.f32 %v2914, 0.0
        %v2924 = vmax.f32 %v2830, 0.0
        %v2925 = vmax.f32 %v2832, 0.0
        %v2926 = vmax.f32 %v2916, 0.0
        %v2927 = vmax.f32 %v2918, 0.0
        %v2928 = vpack.c.bf16 %v2924, %v2920
        %v2929 = vpack.c.bf16 %v2925, %v2921
        %v2930 = vpack.c.bf16 %v2926, %v2922
        %v2931 = vpack.c.bf16 %v2927, %v2923
        %v2932 = vld [vmem:[#allocation10] sm:$0xf]
        %v2933 = vld [vmem:[#allocation10 + $0x4] sm:$0xf]
        %v2934 = vld [vmem:[#allocation10 + $0x8] sm:$0xf]
        %v2935 = vld [vmem:[#allocation10 + $0xc] sm:$0xf]
        %v2936 = vld [vmem:[#allocation10 + $0x10] sm:$0xf]
        %v2937 = vld [vmem:[#allocation10 + $0x14] sm:$0xf]
        %v2938 = vld [vmem:[#allocation10 + $0x18] sm:$0xf]
        %v2939 = vld [vmem:[#allocation10 + $0x1c] sm:$0xf]
        %v2940 = vld [vmem:[#allocation10 + $0x20] sm:$0xf]
        %v2941 = vld [vmem:[#allocation10 + $0x24] sm:$0xf]
        %v2942 = vld [vmem:[#allocation10 + $0x28] sm:$0xf]
        %v2943 = vld [vmem:[#allocation10 + $0x2c] sm:$0xf]
        %v2944 = vld [vmem:[#allocation10 + $0x30] sm:$0xf]
        %v2945 = vld [vmem:[#allocation10 + $0x34] sm:$0xf]
        %v2946 = vld [vmem:[#allocation10 + $0x38] sm:$0xf]
        %v2947 = vld [vmem:[#allocation10 + $0x3c] sm:$0xf]
        %v2948 = vld [vmem:[#allocation10 + $0x40] sm:$0xf]
        %v2949 = vld [vmem:[#allocation10 + $0x44] sm:$0xf]
        %v2950 = vld [vmem:[#allocation10 + $0x48] sm:$0xf]
        %v2951 = vld [vmem:[#allocation10 + $0x4c] sm:$0xf]
        %v2952 = vld [vmem:[#allocation10 + $0x50] sm:$0xf]
        %v2953 = vld [vmem:[#allocation10 + $0x54] sm:$0xf]
        %v2954 = vld [vmem:[#allocation10 + $0x58] sm:$0xf]
        %v2955 = vld [vmem:[#allocation10 + $0x5c] sm:$0xf]
        %v2956 = vld [vmem:[#allocation10 + $0x60] sm:$0xf]
        %v2957 = vld [vmem:[#allocation10 + $0x64] sm:$0xf]
        %v2958 = vld [vmem:[#allocation10 + $0x68] sm:$0xf]
        %v2959 = vld [vmem:[#allocation10 + $0x6c] sm:$0xf]
        %v2960 = vld [vmem:[#allocation10 + $0x70] sm:$0xf]
        %v2961 = vld [vmem:[#allocation10 + $0x74] sm:$0xf]
        %v2962 = vld [vmem:[#allocation10 + $0x78] sm:$0xf]
        %v2963 = vld [vmem:[#allocation10 + $0x7c] sm:$0xf]
        %v2964 = vld [vmem:[#allocation10 + $0x80] sm:$0xf]
        %v2965 = vld [vmem:[#allocation10 + $0x84] sm:$0xf]
        %v2966 = vld [vmem:[#allocation10 + $0x88] sm:$0xf]
        %v2967 = vld [vmem:[#allocation10 + $0x8c] sm:$0xf]
        %v2968 = vld [vmem:[#allocation10 + $0x90] sm:$0xf]
        %v2969 = vld [vmem:[#allocation10 + $0x94] sm:$0xf]
        %v2970 = vld [vmem:[#allocation10 + $0x98] sm:$0xf]
        %v2971 = vld [vmem:[#allocation10 + $0x9c] sm:$0xf]
        %v2972 = vld [vmem:[#allocation10 + $0xa0] sm:$0xf]
        %v2973 = vld [vmem:[#allocation10 + $0xa4] sm:$0xf]
        %v2974 = vld [vmem:[#allocation10 + $0xa8] sm:$0xf]
        %v2975 = vld [vmem:[#allocation10 + $0xac] sm:$0xf]
        %v2976 = vld [vmem:[#allocation10 + $0xb0] sm:$0xf]
        %v2977 = vld [vmem:[#allocation10 + $0xb4] sm:$0xf]
        %v2978 = vld [vmem:[#allocation10 + $0xb8] sm:$0xf]
        %v2979 = vld [vmem:[#allocation10 + $0xbc] sm:$0xf]
        %v2980 = vld [vmem:[#allocation10 + $0xc0] sm:$0xf]
        %v2981 = vld [vmem:[#allocation10 + $0xc4] sm:$0xf]
        %v2982 = vld [vmem:[#allocation10 + $0xc8] sm:$0xf]
        %v2983 = vld [vmem:[#allocation10 + $0xcc] sm:$0xf]
        %v2984 = vld [vmem:[#allocation10 + $0xd0] sm:$0xf]
        %v2985 = vld [vmem:[#allocation10 + $0xd4] sm:$0xf]
        %v2986 = vld [vmem:[#allocation10 + $0xd8] sm:$0xf]
        %v2987 = vld [vmem:[#allocation10 + $0xdc] sm:$0xf]
        %v2988 = vld [vmem:[#allocation10 + $0xe0] sm:$0xf]
        %v2989 = vld [vmem:[#allocation10 + $0xe4] sm:$0xf]
        %v2990 = vld [vmem:[#allocation10 + $0xe8] sm:$0xf]
        %v2991 = vld [vmem:[#allocation10 + $0xec] sm:$0xf]
        %v2992 = vld [vmem:[#allocation10 + $0xf0] sm:$0xf]
        %v2993 = vld [vmem:[#allocation10 + $0xf4] sm:$0xf]
        %v2994 = vld [vmem:[#allocation10 + $0xf8] sm:$0xf]
        %v2995 = vld [vmem:[#allocation10 + $0xfc] sm:$0xf]
        %v2996 = vld [vmem:[%s6] sm:$0x1]
        %v2998 = vlaneseq
        %v2999 = vshrl.u32 %v2998, 7
        %v3000 = vsub.s32 0, %v2999
        %v3001 = vrot.slane %v2996, %v3000
        %v3067 = vunpack.c.l.b16 %v2932
        %v3068 = vunpack.c.l.b16 %v2933
        %v3069 = vunpack.c.l.b16 %v2934
        %v3070 = vunpack.c.l.b16 %v2935
        %v3071 = vunpack.c.l.b16 %v2936
        %v3072 = vunpack.c.l.b16 %v2937
        %v3073 = vunpack.c.l.b16 %v2938
        %v3074 = vunpack.c.l.b16 %v2939
        %v3075 = vunpack.c.l.b16 %v2940
        %v3076 = vunpack.c.l.b16 %v2941
        %v3077 = vunpack.c.l.b16 %v2942
        %v3078 = vunpack.c.l.b16 %v2943
        %v3079 = vunpack.c.l.b16 %v2944
        %v3080 = vunpack.c.l.b16 %v2945
        %v3081 = vunpack.c.l.b16 %v2946
        %v3082 = vunpack.c.l.b16 %v2947
        %v3083 = vunpack.c.l.b16 %v2948
        %v3084 = vunpack.c.l.b16 %v2949
        %v3085 = vunpack.c.l.b16 %v2950
        %v3086 = vunpack.c.l.b16 %v2951
        %v3087 = vunpack.c.l.b16 %v2952
        %v3088 = vunpack.c.l.b16 %v2953
        %v3089 = vunpack.c.l.b16 %v2954
        %v3090 = vunpack.c.l.b16 %v2955
        %v3091 = vunpack.c.l.b16 %v2956
        %v3092 = vunpack.c.l.b16 %v2957
        %v3093 = vunpack.c.l.b16 %v2958
        %v3094 = vunpack.c.l.b16 %v2959
        %v3095 = vunpack.c.l.b16 %v2960
        %v3096 = vunpack.c.l.b16 %v2961
        %v3097 = vunpack.c.l.b16 %v2962
        %v3098 = vunpack.c.l.b16 %v2963
        %v3099 = vunpack.c.l.b16 %v2964
        %v3100 = vunpack.c.l.b16 %v2965
        %v3101 = vunpack.c.l.b16 %v2966
        %v3102 = vunpack.c.l.b16 %v2967
        %v3103 = vunpack.c.l.b16 %v2968
        %v3104 = vunpack.c.l.b16 %v2969
        %v3105 = vunpack.c.l.b16 %v2970
        %v3106 = vunpack.c.l.b16 %v2971
        %v3107 = vunpack.c.l.b16 %v2972
        %v3108 = vunpack.c.l.b16 %v2973
        %v3109 = vunpack.c.l.b16 %v2974
        %v3110 = vunpack.c.l.b16 %v2975
        %v3111 = vunpack.c.l.b16 %v2976
        %v3112 = vunpack.c.l.b16 %v2977
        %v3113 = vunpack.c.l.b16 %v2978
        %v3114 = vunpack.c.l.b16 %v2979
        %v3115 = vunpack.c.l.b16 %v2980
        %v3116 = vunpack.c.l.b16 %v2981
        %v3117 = vunpack.c.l.b16 %v2982
        %v3118 = vunpack.c.l.b16 %v2983
        %v3119 = vunpack.c.l.b16 %v2984
        %v3120 = vunpack.c.l.b16 %v2985
        %v3121 = vunpack.c.l.b16 %v2986
        %v3122 = vunpack.c.l.b16 %v2987
        %v3123 = vunpack.c.l.b16 %v2988
        %v3124 = vunpack.c.l.b16 %v2989
        %v3125 = vunpack.c.l.b16 %v2990
        %v3126 = vunpack.c.l.b16 %v2991
        %v3127 = vunpack.c.l.b16 %v2992
        %v3128 = vunpack.c.l.b16 %v2993
        %v3129 = vunpack.c.l.b16 %v2994
        %v3130 = vunpack.c.l.b16 %v2995
        %v3131 = vpack.c.b16 %v3068, %v3067
        %v3132 = vpack.c.b16 %v3070, %v3069
        %v3133 = vpack.c.b16 %v3072, %v3071
        %v3134 = vpack.c.b16 %v3074, %v3073
        %v3135 = vpack.c.b16 %v3076, %v3075
        %v3136 = vpack.c.b16 %v3078, %v3077
        %v3137 = vpack.c.b16 %v3080, %v3079
        %v3138 = vpack.c.b16 %v3082, %v3081
        %v3139 = vpack.c.b16 %v3084, %v3083
        %v3140 = vpack.c.b16 %v3086, %v3085
        %v3141 = vpack.c.b16 %v3088, %v3087
        %v3142 = vpack.c.b16 %v3090, %v3089
        %v3143 = vpack.c.b16 %v3092, %v3091
        %v3144 = vpack.c.b16 %v3094, %v3093
        %v3145 = vpack.c.b16 %v3096, %v3095
        %v3146 = vpack.c.b16 %v3098, %v3097
        %v3147 = vpack.c.b16 %v3100, %v3099
        %v3148 = vpack.c.b16 %v3102, %v3101
        %v3149 = vpack.c.b16 %v3104, %v3103
        %v3150 = vpack.c.b16 %v3106, %v3105
        %v3151 = vpack.c.b16 %v3108, %v3107
        %v3152 = vpack.c.b16 %v3110, %v3109
        %v3153 = vpack.c.b16 %v3112, %v3111
        %v3154 = vpack.c.b16 %v3114, %v3113
        %v3155 = vpack.c.b16 %v3116, %v3115
        %v3156 = vpack.c.b16 %v3118, %v3117
        %v3157 = vpack.c.b16 %v3120, %v3119
        %v3158 = vpack.c.b16 %v3122, %v3121
        %v3159 = vpack.c.b16 %v3124, %v3123
        %v3160 = vpack.c.b16 %v3126, %v3125
        %v3161 = vpack.c.b16 %v3128, %v3127
        %v3162 = vpack.c.b16 %v3130, %v3129
        %3195 = vmatprep.subr.bf16.mxu0 0
        %3196 = vmatpush1.bf16.msra.mxu0 %v3138
        %3197 = vmatprep.subr.bf16.mxu0 0
        %3198 = vmatpush1.bf16.msra.mxu0 %v3137
        %3199 = vmatprep.subr.bf16.mxu0 0
        %3200 = vmatpush1.bf16.msra.mxu0 %v3136
        %3201 = vmatprep.subr.bf16.mxu0 0
        %3202 = vmatpush1.bf16.msra.mxu0 %v3135
        %3203 = vmatprep.subr.bf16.mxu0 0
        %3204 = vmatpush1.bf16.msra.mxu0 %v3134
        %3205 = vmatprep.subr.bf16.mxu0 0
        %3206 = vmatpush1.bf16.msra.mxu0 %v3133
        %3207 = vmatprep.subr.bf16.mxu0 0
        %3208 = vmatpush1.bf16.msra.mxu0 %v3132
        %3209 = vmatprep.subr.bf16.mxu0 0
        %3210 = vmatpush1.bf16.msra.mxu0 %v3131
        %3211 = vmatprep.subr.bf16.mxu0 0
        %3212 = vmatpush2.bf16.msra.mxu0 %v3146
        %3213 = vmatprep.subr.bf16.mxu0 0
        %3214 = vmatpush2.bf16.msra.mxu0 %v3145
        %3215 = vmatprep.subr.bf16.mxu0 0
        %3216 = vmatpush2.bf16.msra.mxu0 %v3144
        %3217 = vmatprep.subr.bf16.mxu0 0
        %3218 = vmatpush2.bf16.msra.mxu0 %v3143
        %3219 = vmatprep.subr.bf16.mxu0 0
        %3220 = vmatpush2.bf16.msra.mxu0 %v3142
        %3221 = vmatprep.subr.bf16.mxu0 0
        %3222 = vmatpush2.bf16.msra.mxu0 %v3141
        %3223 = vmatprep.subr.bf16.mxu0 0
        %3224 = vmatpush2.bf16.msra.mxu0 %v3140
        %3225 = vmatprep.subr.bf16.mxu0 0
        %3226 = vmatpush2.bf16.msra.mxu0 %v3139
        %3227 = vmatprep.mubr.bf16.mxu0 %v2929
        %3228 = vmatmul.mubr.bf16.gmra.mxu0 %v2928
        %v3229 = vpop.f32.mrf.mxu0
        %v3230 = vadd.f32 %v3001, %v3229
        %v3231 = vpop.f32.mrf.mxu0
        %v3232 = vpop.f32.mrf.mxu0
        %v3233 = vadd.f32 %v3001, %v3232
        %v3234 = vpop.f32.mrf.mxu0
        %3235 = vdwg.mxu0
        %3236 = vmatprep.subr.bf16.mxu0 0
        %3237 = vmatpush1.bf16.msra.mxu0 %v3154
        %3238 = vmatprep.subr.bf16.mxu0 0
        %3239 = vmatpush1.bf16.msra.mxu0 %v3153
        %3240 = vmatprep.subr.bf16.mxu0 0
        %3241 = vmatpush1.bf16.msra.mxu0 %v3152
        %3242 = vmatprep.subr.bf16.mxu0 0
        %3243 = vmatpush1.bf16.msra.mxu0 %v3151
        %3244 = vmatprep.subr.bf16.mxu0 0
        %3245 = vmatpush1.bf16.msra.mxu0 %v3150
        %3246 = vmatprep.subr.bf16.mxu0 0
        %3247 = vmatpush1.bf16.msra.mxu0 %v3149
        %3248 = vmatprep.subr.bf16.mxu0 0
        %3249 = vmatpush1.bf16.msra.mxu0 %v3148
        %3250 = vmatprep.subr.bf16.mxu0 0
        %3251 = vmatpush1.bf16.msra.mxu0 %v3147
        %3252 = vmatprep.subr.bf16.mxu0 0
        %3253 = vmatpush2.bf16.msra.mxu0 %v3162
        %3254 = vmatprep.subr.bf16.mxu0 0
        %3255 = vmatpush2.bf16.msra.mxu0 %v3161
        %3256 = vmatprep.subr.bf16.mxu0 0
        %3257 = vmatpush2.bf16.msra.mxu0 %v3160
        %3258 = vmatprep.subr.bf16.mxu0 0
        %3259 = vmatpush2.bf16.msra.mxu0 %v3159
        %3260 = vmatprep.subr.bf16.mxu0 0
        %3261 = vmatpush2.bf16.msra.mxu0 %v3158
        %3262 = vmatprep.subr.bf16.mxu0 0
        %3263 = vmatpush2.bf16.msra.mxu0 %v3157
        %3264 = vmatprep.subr.bf16.mxu0 0
        %3265 = vmatpush2.bf16.msra.mxu0 %v3156
        %3266 = vmatprep.subr.bf16.mxu0 0
        %3267 = vmatpush2.bf16.msra.mxu0 %v3155
        %3268 = vmatprep.mubr.bf16.mxu0 %v2931
        %3269 = vmatmul.mubr.bf16.gmra.mxu0 %v2930
        %v3270 = vpop.f32.mrf.mxu0
        %v3271 = vadd.f32 %v3230, %v3270
        %v3272 = vpop.f32.mrf.mxu0
        %v3273 = vpop.f32.mrf.mxu0
        %v3274 = vadd.f32 %v3233, %v3273
        %v3275 = vpop.f32.mrf.mxu0
        %3276 = vdwg.mxu0
        %3277 = vst [vmem:[%s353] sm:$0xff] %v3271
        %3278 = vst [vmem:[%s353 + $0x8] sm:$0xff] %v3274
        %s3279 = sand.u32 %s186, 1
        %s3280 = scalar_lea.sflag [#allocation4], %s3279
        %s3281 = sand.u32 %s186, 1
        %s3282 = smul.addr %s3281, 16
        %s3283 = scalar_lea.vmem [#allocation11], %s3282
        // Predicated region
        $region69: #{tpu_custom_call.1} parent=47 // pred_check
          %p3284 = pneg %p196
        $region70: #{tpu_custom_call.1} parent=47 // pred_check_branch
          %3286 = sbr.rel (%p3284) target = $region72
        $region71: #{tpu_custom_call.1} parent=47 // pred_region
          %s3287 = smul.u32 2, %s26
          %s3289 = ssub.s32 256, 256
          %3290 = vsyncadd %s3280, %s3289
          %s3291 = smul.addr %s3287, 128
          %s3292 = scalar_lea.hbm %s7, %s3291
          %s3293 = sshll.u32 %s3283, 4
          %s3294 = int_to_ptr.vmem [resolvable:$true] %s3293
          %3299 = dma.vmem_to_hbm [thread:$0]  %s3294, 256, %s3292, %s3280, 128, 128, 8
        $region72: #{tpu_custom_call.1} parent=47 // pred_fallthru
          _
      $region48: #{tpu_custom_call.1} parent=5 // pred_fallthru
        _
      %p3300 = scmp.le.s32.totalorder 2, %s21
      // Predicated region
      $region73: #{tpu_custom_call.1} parent=5 // pred_check
        %p3301 = pneg %p3300
      $region74: #{tpu_custom_call.1} parent=5 // pred_check_branch
        %3303 = sbr.rel (%p3301) target = $region76
      $region75: #{tpu_custom_call.1} parent=5 // pred_region
        %s3304 = ssub.s32 %s21, 2
        // Predicated region
        $region77: #{tpu_custom_call.1} parent=75 // pred_check
          %p3305 = pneg %p202
        $region78: #{tpu_custom_call.1} parent=75 // pred_check_branch
          %3307 = sbr.rel (%p3305) target = $region80
        $region79: #{tpu_custom_call.1} parent=75 // pred_region
          %s3308 = sand.u32 %s187, 1
          %s3309 = scalar_lea.sflag [#allocation4], %s3308
          %s3310 = sand.u32 %s187, 1
          %s3311 = smul.addr %s3310, 16
          %s3312 = scalar_lea.vmem [#allocation11], %s3311
          %3313 = dma.done %s3309, 256
        $region80: #{tpu_custom_call.1} parent=75 // pred_fallthru
          _
      $region76: #{tpu_custom_call.1} parent=5 // pred_fallthru
        _
    $region6: #{tpu_custom_call.1} parent=1 // loop_footer
      %s25 = sadd.s32 1, %s21
    $region7: #{tpu_custom_call.1} parent=1 // loop_footer_branch
      %20 = sbr.rel target = $region3
    $region8: #{tpu_custom_call.1} parent=1 // loop_exit
      _
    %3314 = vsyncpa [#allocation3], 1
    %s3315 = scalar_lea.sflag [#allocation3], 1
    %3316 = vsyncpa %s3315, 1
    %3317 = vsyncpa [#allocation6], 1
    %3318 = vsyncpa [#allocation9], 1
    %3319 = vsyncpa [#allocation4], 1
    %s3320 = scalar_lea.sflag [#allocation4], 1
    %3321 = vsyncpa %s3320, 1

</llo_original>
